<compile_context>
chip_gen: v7x
topology: tpu7x:2x2x1
jax: 0.10.0
libtpu: 0.0.40
codegen_flags: <defaults>
</compile_context>

<pallas_src>
import math
import functools

import jax
import jax.numpy as jnp
from jax.experimental import pallas as pl
from jax.experimental.pallas import tpu as pltpu


# ----------------------------- small helpers ---------------------------------

def _round_up(n, m):
    return ((n + m - 1) // m) * m


def _pick_tile(n, preferred):
    """Largest multiple-of-128 tile <= preferred that divides n (else n)."""
    if n <= preferred:
        return n
    t = preferred
    while t >= 128:
        if n % t == 0:
            return t
        t -= 128
    return n          # TODO(synk): ragged extents fall back to a single tile.


def _layernorm(x, gamma, beta, eps=1e-5):
    mu = jnp.mean(x, axis=-1, keepdims=True)
    var = jnp.mean(jnp.square(x - mu), axis=-1, keepdims=True)
    return (x - mu) * jax.lax.rsqrt(var + eps) * gamma + beta


def _gelu(x):
    # TODO(synk): PyTorch nn.GELU() uses the exact erf form; tanh approximation
    # is used because erf lowering inside Mosaic is not guaranteed (~1e-3 abs).
    c = math.sqrt(2.0 / math.pi)
    return 0.5 * x * (1.0 + jnp.tanh(c * (x + 0.044715 * x * x * x)))


def _vmem_limit(estimate_bytes):
    # working-set estimate + headroom, clamped well below v7x's 64 MiB/TC.
    return int(min(50 * 1024 * 1024,
                   max(16 * 1024 * 1024, estimate_bytes + (4 << 20))))


# ------------- single-buffered (grid-invariant) weight BlockSpecs -------------

_SINGLE_BUFFER_WEIGHTS = None


def _probe_kernel(x_ref, o_ref):
    o_ref[...] = x_ref[...] + 1.0


def _single_buffer_supported():
    """True if pipeline_mode=pl.Buffered(1) lowers on this JAX/TPU runtime."""
    global _SINGLE_BUFFER_WEIGHTS
    if _SINGLE_BUFFER_WEIGHTS is None:
        try:
            spec = pl.BlockSpec((8, 128), lambda i: (0, 0),
                                pipeline_mode=pl.Buffered(1))
            out = pl.pallas_call(
                _probe_kernel,
                out_shape=jax.ShapeDtypeStruct((8, 128), jnp.float32),
                grid=(1,),
                in_specs=[spec],
                out_specs=pl.BlockSpec((8, 128), lambda i: (0, 0)),
            )(jnp.zeros((8, 128), jnp.float32))
            jax.block_until_ready(out)
            _SINGLE_BUFFER_WEIGHTS = True
        except Exception:
            _SINGLE_BUFFER_WEIGHTS = False
    return _SINGLE_BUFFER_WEIGHTS


def _weight_spec(shape):
    # Weights/biases have a constant block index across the grid; hold them in
    # a single VMEM buffer (no double-buffering) when supported.
    idx = lambda *_, n=len(shape): (0,) * n
    if _single_buffer_supported():
        return pl.BlockSpec(shape, idx, pipeline_mode=pl.Buffered(1))
    return pl.BlockSpec(shape, idx)


# ------------------------------ GPT-2 block kernel ----------------------------

def gpt2_block_kernel(x_ref,
                      ln1g_ref, ln1b_ref,
                      wqkv_ref, bqkv_ref,
                      wo_ref, bo_ref,
                      ln2g_ref, ln2b_ref,
                      w1_ref, b1_ref, w2_ref, b2_ref,
                      o_ref,
                      q_sc, k_sc, v_sc, ctx_sc,
                      *, num_heads, q_tile, ff_chunk):
    x = x_ref[0]                                   # (S, D) f32
    S, D = x.shape
    H = num_heads
    hd = D // H
    scale = 1.0 / math.sqrt(hd)

    # ---------- multi-head self-attention (pre-LN) ----------
    h = _layernorm(x, ln1g_ref[...], ln1b_ref[...])
    qkv = jnp.dot(h.astype(jnp.bfloat16), wqkv_ref[...],
                  preferred_element_type=jnp.float32) + bqkv_ref[...]   # (S, 3D)

    # Head-major bf16 copies into VMEM scratch; scale folded into q once
    # (S*D multiplies instead of H*S^2).
    for hh in range(H):
        lo = hh * hd
        q_sc[hh] = (qkv[:, lo:lo + hd] * scale).astype(jnp.bfloat16)
        k_sc[hh] = qkv[:, D + lo:D + lo + hd].astype(jnp.bfloat16)
        v_sc[hh] = qkv[:, 2 * D + lo:2 * D + lo + hd].astype(jnp.bfloat16)
    k_all = k_sc[...]                              # (H, S, hd) bf16
    v_all = v_sc[...]

    def q_step(off):
        # One head-batched matmul per q-row tile; only one (H, q_tile, S)
        # score tile is live at a time.
        q_blk = q_sc[:, pl.ds(off, q_tile), :]                       # (H, tq, hd)
        s = jnp.einsum('hqd,hkd->hqk', q_blk, k_all,
                       preferred_element_type=jnp.float32)           # (H, tq, S)
        row = jax.lax.broadcasted_iota(jnp.int32, (q_tile, S), 0) + off
        col = jax.lax.broadcasted_iota(jnp.int32, (q_tile, S), 1)
        s = jnp.where((col <= row)[None], s, jnp.float32(-1e30))
        s = s - jnp.max(s, axis=-1, keepdims=True)
        p = jnp.exp(s)
        p = p / jnp.sum(p, axis=-1, keepdims=True)                   # exact softmax
        c = jnp.einsum('hqk,hkd->hqd', p.astype(jnp.bfloat16), v_all,
                       preferred_element_type=jnp.float32)           # (H, tq, hd)
        # write each head's context straight into the (S, D) scratch.
        for hh in range(H):
            ctx_sc[pl.ds(off, q_tile), hh * hd:(hh + 1) * hd] = c[hh]

    n_q = S // q_tile
    if n_q == 1:
        q_step(0)
    else:
        def q_body(t, carry):
            q_step(pl.multiple_of(t * q_tile, q_tile))
            return carry
        jax.lax.fori_loop(0, n_q, q_body, 0)

    # single output projection over the full (S, D) context (MXU, K = D).
    attn = jnp.dot(ctx_sc[...].astype(jnp.bfloat16), wo_ref[...],
                   preferred_element_type=jnp.float32) + bo_ref[...]
    x = x + attn                                   # residual 1

    # ---------- feed-forward (pre-LN), chunked over d_ff ----------
    h2 = _layernorm(x, ln2g_ref[...], ln2b_ref[...]).astype(jnp.bfloat16)
    d_ff = w1_ref.shape[1]
    n_ff = d_ff // ff_chunk

    def ff_step(c0, y):
        f = jnp.dot(h2, w1_ref[:, pl.ds(c0, ff_chunk)],
                    preferred_element_type=jnp.float32) + b1_ref[:, pl.ds(c0, ff_chunk)]
        f = _gelu(f)
        return y + jnp.dot(f.astype(jnp.bfloat16), w2_ref[pl.ds(c0, ff_chunk), :],
                           preferred_element_type=jnp.float32)

    y0 = jnp.zeros((S, D), jnp.float32)
    if n_ff == 1:
        y = ff_step(0, y0)
    else:
        y = jax.lax.fori_loop(
            0, n_ff,
            lambda i, y: ff_step(pl.multiple_of(i * ff_chunk, ff_chunk), y), y0)

    o_ref[0] = x + y + b2_ref[...]                 # residual 2 (dropout = identity)


def run_block(x, p, num_heads):
    B, S, D = x.shape
    H = num_heads
    hd = D // H
    d_ff = p["w1"].shape[1]
    q_tile = _pick_tile(S, 128)
    ff_chunk = _pick_tile(d_ff, 512)

    in_specs = [
        pl.BlockSpec((1, S, D), lambda b: (b, 0, 0)),   # x (per-batch tile)
        _weight_spec((1, D)), _weight_spec((1, D)),     # ln1 gamma/beta
        _weight_spec((D, 3 * D)), _weight_spec((1, 3 * D)),   # fused Wqkv, bqkv
        _weight_spec((D, D)), _weight_spec((1, D)),     # Wo, bo
        _weight_spec((1, D)), _weight_spec((1, D)),     # ln2 gamma/beta
        _weight_spec((D, d_ff)), _weight_spec((1, d_ff)),     # W1, b1
        _weight_spec((d_ff, D)), _weight_spec((1, D)),  # W2, b2
    ]
    operands = (x,
                p["ln1_g"], p["ln1_b"],
                p["wqkv"], p["bqkv"],
                p["wo"], p["bo"],
                p["ln2_g"], p["ln2_b"],
                p["w1"], p["b1"], p["w2"], p["b2"])

    weight_bytes = sum(a.nbytes for a in operands[1:])
    wfactor = 1 if _single_buffer_supported() else 2
    act = S * D * 4
    hd_pad = _round_up(hd, 128) if hd < 128 else hd
    est = (4 * act                                   # x in/out, double-buffered
           + wfactor * weight_bytes                  # weights / biases
           + 3 * H * S * hd_pad * 2 + act            # q/k/v + ctx scratch
           + S * 3 * D * 4                           # qkv f32
           + H * q_tile * S * 6                      # scores f32 + probs bf16
           + S * ff_chunk * 6                        # FFN hidden f32 + bf16
           + 3 * act)                                # h / h2 / y temporaries

    # TODO(synk): for B == 1 on v7x, add a grid axis over S q-tiles so both
    #             TensorCores get work (batch is currently the only grid axis).
    return pl.pallas_call(
        functools.partial(gpt2_block_kernel, num_heads=H,
                          q_tile=q_tile, ff_chunk=ff_chunk),
        out_shape=jax.ShapeDtypeStruct((B, S, D), jnp.float32),
        grid=(B,),
        in_specs=in_specs,
        out_specs=pl.BlockSpec((1, S, D), lambda b: (b, 0, 0)),
        scratch_shapes=[
            pltpu.VMEM((H, S, hd), jnp.bfloat16),    # q (head-major, pre-scaled)
            pltpu.VMEM((H, S, hd), jnp.bfloat16),    # k
            pltpu.VMEM((H, S, hd), jnp.bfloat16),    # v
            pltpu.VMEM((S, D), jnp.float32),         # attention context
        ],
        compiler_params=pltpu.CompilerParams(
            dimension_semantics=("parallel",),
            vmem_limit_bytes=_vmem_limit(est)),
    )(*operands)


# ---------------------- final LayerNorm + tied LM head ------------------------

def lnf_kernel(x_ref, g_ref, b_ref, o_ref):
    o_ref[0] = _layernorm(x_ref[0], g_ref[...], b_ref[...]).astype(o_ref.dtype)


def run_lnf(x, gamma, beta):
    B, S, D = x.shape
    return pl.pallas_call(
        lnf_kernel,
        out_shape=jax.ShapeDtypeStruct((B, S, D), jnp.bfloat16),
        grid=(B,),
        in_specs=[pl.BlockSpec((1, S, D), lambda b: (b, 0, 0)),
                  _weight_spec((1, D)), _weight_spec((1, D))],
        out_specs=pl.BlockSpec((1, S, D), lambda b: (b, 0, 0)),
        compiler_params=pltpu.CompilerParams(
            dimension_semantics=("parallel",)),
    )(x, gamma, beta)


def head_kernel(x_ref, w_ref, o_ref):
    # pure MXU matmul: ln_f already applied, embedding already (D, tile_v) bf16.
    o_ref[0] = jnp.dot(x_ref[0], w_ref[...], preferred_element_type=jnp.float32)


def run_head(xn, w_head, tile_v):
    B, S, D = xn.shape
    V_pad = w_head.shape[1]
    nv = V_pad // tile_v
    est = 2 * (S * D * 2) + 2 * (D * tile_v * 2) + 3 * (S * tile_v * 4)
    return pl.pallas_call(
        head_kernel,
        out_shape=jax.ShapeDtypeStruct((B, S, V_pad), jnp.float32),
        # vocab OUTER / batch inner: the (D, tile_v) embedding tile keeps the
        # same block index across the inner batch loop, so it is streamed from
        # HBM once per vocab tile instead of once per (batch, vocab) step.
        grid=(nv, B),
        in_specs=[pl.BlockSpec((1, S, D), lambda v, b: (b, 0, 0)),
                  pl.BlockSpec((D, tile_v), lambda v, b: (0, v))],
        out_specs=pl.BlockSpec((1, S, tile_v), lambda v, b: (b, 0, v)),
        compiler_params=pltpu.CompilerParams(
            dimension_semantics=("parallel", "parallel"),
            vmem_limit_bytes=_vmem_limit(est)),
    )(xn, w_head)


# --------------------------------- full model ---------------------------------

def gpt2_forward(input_ids, params, num_heads):
    B, S = input_ids.shape
    V, D = params["tok_emb"].shape

    # embedding gathers are glue (plain JAX)
    tok = jnp.take(params["tok_emb"], input_ids, axis=0)          # (B, S, D) f32
    pos = params["pos_emb"][:S][None, :, :]                       # (1, S, D)
    x = tok + pos
    for blk in params["blocks"]:
        x = run_block(x, blk, num_heads)

    xn = run_lnf(x, params["lnf_g"], params["lnf_b"])             # (B, S, D) bf16

    # tied LM head: logits = ln_f(x) @ tok_emb^T.  One-time transpose + pad of
    # the embedding to a lane-dense (D, V_pad) bf16 matrix (V_pad % tile_v == 0),
    # padded logits sliced off afterwards.
    # TODO(synk): optionally int8-quantize the tied embedding on v5e/v6e.
    tile_v = min(1024, _round_up(V, 128))
    V_pad = _round_up(V, tile_v)
    emb = params["tok_emb"]
    if V_pad != V:
        emb = jnp.pad(emb, ((0, V_pad - V), (0, 0)))
    w_head = emb.T.astype(jnp.bfloat16)                           # (D, V_pad)
    logits = run_head(xn, w_head, tile_v)
    return logits[..., :V]


def init_params(key, cfg):
    V, S, D = cfg["vocab_size"], cfg["seq_len"], cfg["d_model"]
    F, L = cfg["d_ff"], cfg["num_layers"]
    keys = iter(jax.random.split(key, 4 + 8 * L))

    def nrm(shape, scale=0.02, dtype=jnp.float32):
        return (scale * jax.random.normal(next(keys), shape)).astype(dtype)

    params = {
        "tok_emb": nrm((V, D), 1.0),            # nn.Embedding default ~ N(0, 1)
        "pos_emb": nrm((S, D), 1.0),
        "lnf_g": jnp.ones((1, D), jnp.float32),
        "lnf_b": jnp.zeros((1, D), jnp.float32),
        "blocks": [],
    }
    for _ in range(L):
        params["blocks"].append({
            "ln1_g": jnp.ones((1, D), jnp.float32),
            "ln1_b": jnp.zeros((1, D), jnp.float32),
            # fused QKV projection stored (in, out) = (D, 3D) in bf16.
            "wqkv": nrm((D, 3 * D), dtype=jnp.bfloat16),
            "bqkv": nrm((1, 3 * D)),
            "wo": nrm((D, D), dtype=jnp.bfloat16), "bo": nrm((1, D)),
            "ln2_g": jnp.ones((1, D), jnp.float32),
            "ln2_b": jnp.zeros((1, D), jnp.float32),
            "w1": nrm((D, F), dtype=jnp.bfloat16), "b1": nrm((1, F)),
            "w2": nrm((F, D), dtype=jnp.bfloat16), "b2": nrm((1, D)),
        })
    return params


if __name__ == "__main__":
    cfg = dict(vocab_size=128, seq_len=8, d_model=32,
               num_heads=4, num_layers=2, d_ff=64)
    key = jax.random.PRNGKey(0)
    pkey, dkey = jax.random.split(key)
    params = init_params(pkey, cfg)

    B = 2
    input_ids = jax.random.randint(dkey, (B, cfg["seq_len"]), 0,
                                   cfg["vocab_size"], dtype=jnp.int32)

    logits = gpt2_forward(input_ids, params, cfg["num_heads"])
    logits = jax.block_until_ready(logits)
    assert logits.shape == (B, cfg["seq_len"], cfg["vocab_size"])
    assert bool(jnp.all(jnp.isfinite(logits)))
    print("KERNEL_OK")
</pallas_src>

<mosaic_0001>
module attributes {stable_mosaic.version = 11 : i64} {
  func.func @_probe_kernel(%arg0: i32, %arg1: memref<8x128xf32, #tpu.memory_space<vmem>>, %arg2: memref<8x128xf32, #tpu.memory_space<vmem>>) attributes {dimension_semantics = [#tpu.dimension_semantics<arbitrary>], iteration_bounds = array<i64: 1>, scalar_prefetch = 0 : i64, scratch_operands = 0 : i64, tpu.core_type = #tpu.core_type<tc>, window_params = [{pipeline_mode = #tpu.pipeline_mode<synchronous>, transform_indices = @transform_0, window_bounds = array<i64: 8, 128>}, {pipeline_mode = #tpu.pipeline_mode<synchronous>, transform_indices = @transform_1, window_bounds = array<i64: 8, 128>}]} {
    %c0 = arith.constant 0 : index
    %c0_0 = arith.constant 0 : index
    %0 = vector.load %arg1[%c0, %c0_0] : memref<8x128xf32, #tpu.memory_space<vmem>>, vector<8x128xf32>
    %cst = arith.constant 1.000000e+00 : f32
    %1 = vector.broadcast %cst : f32 to vector<8x128xf32>
    %2 = arith.addf %0, %1 : vector<8x128xf32>
    %c0_1 = arith.constant 0 : index
    %c0_2 = arith.constant 0 : index
    %3 = vector.load %arg2[%c0_1, %c0_2] : memref<8x128xf32, #tpu.memory_space<vmem>>, vector<8x128xf32>
    tpu.vector_store %arg2[%c0_1, %c0_2], %2 {strides = array<i32>} : memref<8x128xf32, #tpu.memory_space<vmem>>, vector<8x128xf32>,
    return
  }
  func.func @transform_0(%arg0: i32) -> (i32, i32) {
    %c0_i32 = arith.constant 0 : i32
    %c0_i32_0 = arith.constant 0 : i32
    %c0_i32_1 = arith.constant 0 : i32
    return %c0_i32, %c0_i32_0 : i32, i32
  }
  func.func @transform_1(%arg0: i32) -> (i32, i32) {
    %c0_i32 = arith.constant 0 : i32
    %c0_i32_0 = arith.constant 0 : i32
    %c0_i32_1 = arith.constant 0 : i32
    return %c0_i32, %c0_i32_0 : i32, i32
  }
}

module attributes {stable_mosaic.version = 11 : i64} {
  func.func @gpt2_block_kernel(%arg0: i32, %arg1: memref<1x8x32xf32, #tpu.memory_space<vmem>>, %arg2: memref<1x32xf32, #tpu.memory_space<vmem>>, %arg3: memref<1x32xf32, #tpu.memory_space<vmem>>, %arg4: memref<32x96xbf16, #tpu.memory_space<vmem>>, %arg5: memref<1x96xf32, #tpu.memory_space<vmem>>, %arg6: memref<32x32xbf16, #tpu.memory_space<vmem>>, %arg7: memref<1x32xf32, #tpu.memory_space<vmem>>, %arg8: memref<1x32xf32, #tpu.memory_space<vmem>>, %arg9: memref<1x32xf32, #tpu.memory_space<vmem>>, %arg10: memref<32x64xbf16, #tpu.memory_space<vmem>>, %arg11: memref<1x64xf32, #tpu.memory_space<vmem>>, %arg12: memref<64x32xbf16, #tpu.memory_space<vmem>>, %arg13: memref<1x32xf32, #tpu.memory_space<vmem>>, %arg14: memref<1x8x32xf32, #tpu.memory_space<vmem>>, %arg15: memref<4x8x8xbf16, #tpu.memory_space<vmem>>, %arg16: memref<4x8x8xbf16, #tpu.memory_space<vmem>>, %arg17: memref<4x8x8xbf16, #tpu.memory_space<vmem>>, %arg18: memref<8x32xf32, #tpu.memory_space<vmem>>) attributes {dimension_semantics = [#tpu.dimension_semantics<parallel>], iteration_bounds = array<i64: 2>, scalar_prefetch = 0 : i64, scratch_operands = 4 : i64, tpu.core_type = #tpu.core_type<tc>, window_params = [{transform_indices = @transform_0, window_bounds = array<i64: 1, 8, 32>}, {pipeline_mode = #tpu.pipeline_mode<synchronous>, transform_indices = @transform_1, window_bounds = array<i64: 1, 32>}, {pipeline_mode = #tpu.pipeline_mode<synchronous>, transform_indices = @transform_2, window_bounds = array<i64: 1, 32>}, {pipeline_mode = #tpu.pipeline_mode<synchronous>, transform_indices = @transform_3, window_bounds = array<i64: 32, 96>}, {pipeline_mode = #tpu.pipeline_mode<synchronous>, transform_indices = @transform_4, window_bounds = array<i64: 1, 96>}, {pipeline_mode = #tpu.pipeline_mode<synchronous>, transform_indices = @transform_5, window_bounds = array<i64: 32, 32>}, {pipeline_mode = #tpu.pipeline_mode<synchronous>, transform_indices = @transform_6, window_bounds = array<i64: 1, 32>}, {pipeline_mode = #tpu.pipeline_mode<synchronous>, transform_indices = @transform_7, window_bounds = array<i64: 1, 32>}, {pipeline_mode = #tpu.pipeline_mode<synchronous>, transform_indices = @transform_8, window_bounds = array<i64: 1, 32>}, {pipeline_mode = #tpu.pipeline_mode<synchronous>, transform_indices = @transform_9, window_bounds = array<i64: 32, 64>}, {pipeline_mode = #tpu.pipeline_mode<synchronous>, transform_indices = @transform_10, window_bounds = array<i64: 1, 64>}, {pipeline_mode = #tpu.pipeline_mode<synchronous>, transform_indices = @transform_11, window_bounds = array<i64: 64, 32>}, {pipeline_mode = #tpu.pipeline_mode<synchronous>, transform_indices = @transform_12, window_bounds = array<i64: 1, 32>}, {transform_indices = @transform_13, window_bounds = array<i64: 1, 8, 32>}]} {
    %c0 = arith.constant 0 : index
    %c0_0 = arith.constant 0 : index
    %c0_1 = arith.constant 0 : index
    %0 = vector.load %arg1[%c0, %c0_0, %c0_1] : memref<1x8x32xf32, #tpu.memory_space<vmem>>, vector<1x8x32xf32>
    %1 = vector.shape_cast %0 : vector<1x8x32xf32> to vector<8x32xf32>
    %c0_2 = arith.constant 0 : index
    %c0_3 = arith.constant 0 : index
    %2 = vector.load %arg2[%c0_2, %c0_3] : memref<1x32xf32, #tpu.memory_space<vmem>>, vector<1x32xf32>
    %c0_4 = arith.constant 0 : index
    %c0_5 = arith.constant 0 : index
    %3 = vector.load %arg3[%c0_4, %c0_5] : memref<1x32xf32, #tpu.memory_space<vmem>>, vector<1x32xf32>
    %cst = arith.constant dense<0.000000e+00> : vector<8xf32>
    %4 = vector.multi_reduction <add>, %1, %cst [1] : vector<8x32xf32> to vector<8xf32>
    %5 = vector.shape_cast %4 : vector<8xf32> to vector<8x1xf32>
    %cst_6 = arith.constant 3.200000e+01 : f32
    %6 = vector.broadcast %cst_6 : f32 to vector<8x1xf32>
    %7 = arith.divf %5, %6 : vector<8x1xf32>
    %8 = vector.broadcast %7 : vector<8x1xf32> to vector<8x32xf32>
    %9 = arith.subf %1, %8 : vector<8x32xf32>
    %10 = arith.mulf %9, %9 : vector<8x32xf32>
    %cst_7 = arith.constant dense<0.000000e+00> : vector<8xf32>
    %11 = vector.multi_reduction <add>, %10, %cst_7 [1] : vector<8x32xf32> to vector<8xf32>
    %12 = vector.shape_cast %11 : vector<8xf32> to vector<8x1xf32>
    %cst_8 = arith.constant 3.200000e+01 : f32
    %13 = vector.broadcast %cst_8 : f32 to vector<8x1xf32>
    %14 = arith.divf %12, %13 : vector<8x1xf32>
    %15 = vector.broadcast %7 : vector<8x1xf32> to vector<8x32xf32>
    %16 = arith.subf %1, %15 : vector<8x32xf32>
    %cst_9 = arith.constant 9.99999974E-6 : f32
    %17 = vector.broadcast %cst_9 : f32 to vector<8x1xf32>
    %18 = arith.addf %14, %17 : vector<8x1xf32>
    %19 = math.rsqrt %18 : vector<8x1xf32>
    %20 = vector.broadcast %19 : vector<8x1xf32> to vector<8x32xf32>
    %21 = arith.mulf %16, %20 : vector<8x32xf32>
    %22 = vector.broadcast %2 : vector<1x32xf32> to vector<8x32xf32>
    %23 = arith.mulf %21, %22 : vector<8x32xf32>
    %24 = vector.broadcast %3 : vector<1x32xf32> to vector<8x32xf32>
    %25 = arith.addf %23, %24 : vector<8x32xf32>
    %26 = arith.truncf %25 : vector<8x32xf32> to vector<8x32xbf16>
    %c0_10 = arith.constant 0 : index
    %c0_11 = arith.constant 0 : index
    %27 = vector.load %arg4[%c0_10, %c0_11] : memref<32x96xbf16, #tpu.memory_space<vmem>>, vector<32x96xbf16>
    %cst_12 = arith.constant dense<0.000000e+00> : vector<8x96xf32>
    %28 = tpu.matmul %26, %27, %cst_12 {dimension_numbers = #tpu.dot_dimension_numbers<[1], [0], [0], [1], [0, 0, 1, 1], [], []>} : vector<8x32xbf16>, vector<32x96xbf16>, vector<8x96xf32> -> vector<8x96xf32>
    %c0_13 = arith.constant 0 : index
    %c0_14 = arith.constant 0 : index
    %29 = vector.load %arg5[%c0_13, %c0_14] : memref<1x96xf32, #tpu.memory_space<vmem>>, vector<1x96xf32>
    %30 = vector.broadcast %29 : vector<1x96xf32> to vector<8x96xf32>
    %31 = arith.addf %28, %30 : vector<8x96xf32>
    %32 = vector.extract_strided_slice %31 {offsets = [0, 0], sizes = [8, 8], strides = [1, 1]} : vector<8x96xf32> to vector<8x8xf32>
    %cst_15 = arith.constant 0.353553385 : f32
    %33 = vector.broadcast %cst_15 : f32 to vector<8x8xf32>
    %34 = arith.mulf %32, %33 : vector<8x8xf32>
    %35 = arith.truncf %34 : vector<8x8xf32> to vector<8x8xbf16>
    %c0_16 = arith.constant 0 : index
    %c0_17 = arith.constant 0 : index
    %c0_18 = arith.constant 0 : index
    %36 = vector.load %arg15[%c0_16, %c0_17, %c0_18] : memref<4x8x8xbf16, #tpu.memory_space<vmem>>, vector<1x8x8xbf16>
    %37 = vector.shape_cast %36 : vector<1x8x8xbf16> to vector<8x8xbf16>
    %38 = vector.shape_cast %35 : vector<8x8xbf16> to vector<1x8x8xbf16>
    tpu.vector_store %arg15[%c0_16, %c0_17, %c0_18], %38 {strides = array<i32>} : memref<4x8x8xbf16, #tpu.memory_space<vmem>>, vector<1x8x8xbf16>,
    %39 = vector.extract_strided_slice %31 {offsets = [0, 32], sizes = [8, 8], strides = [1, 1]} : vector<8x96xf32> to vector<8x8xf32>
    %40 = arith.truncf %39 : vector<8x8xf32> to vector<8x8xbf16>
    %c0_19 = arith.constant 0 : index
    %c0_20 = arith.constant 0 : index
    %c0_21 = arith.constant 0 : index
    %41 = vector.load %arg16[%c0_19, %c0_20, %c0_21] : memref<4x8x8xbf16, #tpu.memory_space<vmem>>, vector<1x8x8xbf16>
    %42 = vector.shape_cast %41 : vector<1x8x8xbf16> to vector<8x8xbf16>
    %43 = vector.shape_cast %40 : vector<8x8xbf16> to vector<1x8x8xbf16>
    tpu.vector_store %arg16[%c0_19, %c0_20, %c0_21], %43 {strides = array<i32>} : memref<4x8x8xbf16, #tpu.memory_space<vmem>>, vector<1x8x8xbf16>,
    %44 = vector.extract_strided_slice %31 {offsets = [0, 64], sizes = [8, 8], strides = [1, 1]} : vector<8x96xf32> to vector<8x8xf32>
    %45 = arith.truncf %44 : vector<8x8xf32> to vector<8x8xbf16>
    %c0_22 = arith.constant 0 : index
    %c0_23 = arith.constant 0 : index
    %c0_24 = arith.constant 0 : index
    %46 = vector.load %arg17[%c0_22, %c0_23, %c0_24] : memref<4x8x8xbf16, #tpu.memory_space<vmem>>, vector<1x8x8xbf16>
    %47 = vector.shape_cast %46 : vector<1x8x8xbf16> to vector<8x8xbf16>
    %48 = vector.shape_cast %45 : vector<8x8xbf16> to vector<1x8x8xbf16>
    tpu.vector_store %arg17[%c0_22, %c0_23, %c0_24], %48 {strides = array<i32>} : memref<4x8x8xbf16, #tpu.memory_space<vmem>>, vector<1x8x8xbf16>,
    %49 = vector.extract_strided_slice %31 {offsets = [0, 8], sizes = [8, 8], strides = [1, 1]} : vector<8x96xf32> to vector<8x8xf32>
    %cst_25 = arith.constant 0.353553385 : f32
    %50 = vector.broadcast %cst_25 : f32 to vector<8x8xf32>
    %51 = arith.mulf %49, %50 : vector<8x8xf32>
    %52 = arith.truncf %51 : vector<8x8xf32> to vector<8x8xbf16>
    %c1 = arith.constant 1 : index
    %c0_26 = arith.constant 0 : index
    %c0_27 = arith.constant 0 : index
    %53 = vector.load %arg15[%c1, %c0_26, %c0_27] : memref<4x8x8xbf16, #tpu.memory_space<vmem>>, vector<1x8x8xbf16>
    %54 = vector.shape_cast %53 : vector<1x8x8xbf16> to vector<8x8xbf16>
    %55 = vector.shape_cast %52 : vector<8x8xbf16> to vector<1x8x8xbf16>
    tpu.vector_store %arg15[%c1, %c0_26, %c0_27], %55 {strides = array<i32>} : memref<4x8x8xbf16, #tpu.memory_space<vmem>>, vector<1x8x8xbf16>,
    %56 = vector.extract_strided_slice %31 {offsets = [0, 40], sizes = [8, 8], strides = [1, 1]} : vector<8x96xf32> to vector<8x8xf32>
    %57 = arith.truncf %56 : vector<8x8xf32> to vector<8x8xbf16>
    %c1_28 = arith.constant 1 : index
    %c0_29 = arith.constant 0 : index
    %c0_30 = arith.constant 0 : index
    %58 = vector.load %arg16[%c1_28, %c0_29, %c0_30] : memref<4x8x8xbf16, #tpu.memory_space<vmem>>, vector<1x8x8xbf16>
    %59 = vector.shape_cast %58 : vector<1x8x8xbf16> to vector<8x8xbf16>
    %60 = vector.shape_cast %57 : vector<8x8xbf16> to vector<1x8x8xbf16>
    tpu.vector_store %arg16[%c1_28, %c0_29, %c0_30], %60 {strides = array<i32>} : memref<4x8x8xbf16, #tpu.memory_space<vmem>>, vector<1x8x8xbf16>,
    %61 = vector.extract_strided_slice %31 {offsets = [0, 72], sizes = [8, 8], strides = [1, 1]} : vector<8x96xf32> to vector<8x8xf32>
    %62 = arith.truncf %61 : vector<8x8xf32> to vector<8x8xbf16>
    %c1_31 = arith.constant 1 : index
    %c0_32 = arith.constant 0 : index
    %c0_33 = arith.constant 0 : index
    %63 = vector.load %arg17[%c1_31, %c0_32, %c0_33] : memref<4x8x8xbf16, #tpu.memory_space<vmem>>, vector<1x8x8xbf16>
    %64 = vector.shape_cast %63 : vector<1x8x8xbf16> to vector<8x8xbf16>
    %65 = vector.shape_cast %62 : vector<8x8xbf16> to vector<1x8x8xbf16>
    tpu.vector_store %arg17[%c1_31, %c0_32, %c0_33], %65 {strides = array<i32>} : memref<4x8x8xbf16, #tpu.memory_space<vmem>>, vector<1x8x8xbf16>,
    %66 = vector.extract_strided_slice %31 {offsets = [0, 16], sizes = [8, 8], strides = [1, 1]} : vector<8x96xf32> to vector<8x8xf32>
    %cst_34 = arith.constant 0.353553385 : f32
    %67 = vector.broadcast %cst_34 : f32 to vector<8x8xf32>
    %68 = arith.mulf %66, %67 : vector<8x8xf32>
    %69 = arith.truncf %68 : vector<8x8xf32> to vector<8x8xbf16>
    %c2 = arith.constant 2 : index
    %c0_35 = arith.constant 0 : index
    %c0_36 = arith.constant 0 : index
    %70 = vector.load %arg15[%c2, %c0_35, %c0_36] : memref<4x8x8xbf16, #tpu.memory_space<vmem>>, vector<1x8x8xbf16>
    %71 = vector.shape_cast %70 : vector<1x8x8xbf16> to vector<8x8xbf16>
    %72 = vector.shape_cast %69 : vector<8x8xbf16> to vector<1x8x8xbf16>
    tpu.vector_store %arg15[%c2, %c0_35, %c0_36], %72 {strides = array<i32>} : memref<4x8x8xbf16, #tpu.memory_space<vmem>>, vector<1x8x8xbf16>,
    %73 = vector.extract_strided_slice %31 {offsets = [0, 48], sizes = [8, 8], strides = [1, 1]} : vector<8x96xf32> to vector<8x8xf32>
    %74 = arith.truncf %73 : vector<8x8xf32> to vector<8x8xbf16>
    %c2_37 = arith.constant 2 : index
    %c0_38 = arith.constant 0 : index
    %c0_39 = arith.constant 0 : index
    %75 = vector.load %arg16[%c2_37, %c0_38, %c0_39] : memref<4x8x8xbf16, #tpu.memory_space<vmem>>, vector<1x8x8xbf16>
    %76 = vector.shape_cast %75 : vector<1x8x8xbf16> to vector<8x8xbf16>
    %77 = vector.shape_cast %74 : vector<8x8xbf16> to vector<1x8x8xbf16>
    tpu.vector_store %arg16[%c2_37, %c0_38, %c0_39], %77 {strides = array<i32>} : memref<4x8x8xbf16, #tpu.memory_space<vmem>>, vector<1x8x8xbf16>,
    %78 = vector.extract_strided_slice %31 {offsets = [0, 80], sizes = [8, 8], strides = [1, 1]} : vector<8x96xf32> to vector<8x8xf32>
    %79 = arith.truncf %78 : vector<8x8xf32> to vector<8x8xbf16>
    %c2_40 = arith.constant 2 : index
    %c0_41 = arith.constant 0 : index
    %c0_42 = arith.constant 0 : index
    %80 = vector.load %arg17[%c2_40, %c0_41, %c0_42] : memref<4x8x8xbf16, #tpu.memory_space<vmem>>, vector<1x8x8xbf16>
    %81 = vector.shape_cast %80 : vector<1x8x8xbf16> to vector<8x8xbf16>
    %82 = vector.shape_cast %79 : vector<8x8xbf16> to vector<1x8x8xbf16>
    tpu.vector_store %arg17[%c2_40, %c0_41, %c0_42], %82 {strides = array<i32>} : memref<4x8x8xbf16, #tpu.memory_space<vmem>>, vector<1x8x8xbf16>,
    %83 = vector.extract_strided_slice %31 {offsets = [0, 24], sizes = [8, 8], strides = [1, 1]} : vector<8x96xf32> to vector<8x8xf32>
    %cst_43 = arith.constant 0.353553385 : f32
    %84 = vector.broadcast %cst_43 : f32 to vector<8x8xf32>
    %85 = arith.mulf %83, %84 : vector<8x8xf32>
    %86 = arith.truncf %85 : vector<8x8xf32> to vector<8x8xbf16>
    %c3 = arith.constant 3 : index
    %c0_44 = arith.constant 0 : index
    %c0_45 = arith.constant 0 : index
    %87 = vector.load %arg15[%c3, %c0_44, %c0_45] : memref<4x8x8xbf16, #tpu.memory_space<vmem>>, vector<1x8x8xbf16>
    %88 = vector.shape_cast %87 : vector<1x8x8xbf16> to vector<8x8xbf16>
    %89 = vector.shape_cast %86 : vector<8x8xbf16> to vector<1x8x8xbf16>
    tpu.vector_store %arg15[%c3, %c0_44, %c0_45], %89 {strides = array<i32>} : memref<4x8x8xbf16, #tpu.memory_space<vmem>>, vector<1x8x8xbf16>,
    %90 = vector.extract_strided_slice %31 {offsets = [0, 56], sizes = [8, 8], strides = [1, 1]} : vector<8x96xf32> to vector<8x8xf32>
    %91 = arith.truncf %90 : vector<8x8xf32> to vector<8x8xbf16>
    %c3_46 = arith.constant 3 : index
    %c0_47 = arith.constant 0 : index
    %c0_48 = arith.constant 0 : index
    %92 = vector.load %arg16[%c3_46, %c0_47, %c0_48] : memref<4x8x8xbf16, #tpu.memory_space<vmem>>, vector<1x8x8xbf16>
    %93 = vector.shape_cast %92 : vector<1x8x8xbf16> to vector<8x8xbf16>
    %94 = vector.shape_cast %91 : vector<8x8xbf16> to vector<1x8x8xbf16>
    tpu.vector_store %arg16[%c3_46, %c0_47, %c0_48], %94 {strides = array<i32>} : memref<4x8x8xbf16, #tpu.memory_space<vmem>>, vector<1x8x8xbf16>,
    %95 = vector.extract_strided_slice %31 {offsets = [0, 88], sizes = [8, 8], strides = [1, 1]} : vector<8x96xf32> to vector<8x8xf32>
    %96 = arith.truncf %95 : vector<8x8xf32> to vector<8x8xbf16>
    %c3_49 = arith.constant 3 : index
    %c0_50 = arith.constant 0 : index
    %c0_51 = arith.constant 0 : index
    %97 = vector.load %arg17[%c3_49, %c0_50, %c0_51] : memref<4x8x8xbf16, #tpu.memory_space<vmem>>, vector<1x8x8xbf16>
    %98 = vector.shape_cast %97 : vector<1x8x8xbf16> to vector<8x8xbf16>
    %99 = vector.shape_cast %96 : vector<8x8xbf16> to vector<1x8x8xbf16>
    tpu.vector_store %arg17[%c3_49, %c0_50, %c0_51], %99 {strides = array<i32>} : memref<4x8x8xbf16, #tpu.memory_space<vmem>>, vector<1x8x8xbf16>,
    %c0_52 = arith.constant 0 : index
    %c0_53 = arith.constant 0 : index
    %c0_54 = arith.constant 0 : index
    %100 = vector.load %arg16[%c0_52, %c0_53, %c0_54] : memref<4x8x8xbf16, #tpu.memory_space<vmem>>, vector<4x8x8xbf16>
    %c0_55 = arith.constant 0 : index
    %c0_56 = arith.constant 0 : index
    %c0_57 = arith.constant 0 : index
    %101 = vector.load %arg17[%c0_55, %c0_56, %c0_57] : memref<4x8x8xbf16, #tpu.memory_space<vmem>>, vector<4x8x8xbf16>
    %c0_58 = arith.constant 0 : index
    %c0_59 = arith.constant 0 : index
    %c0_60 = arith.constant 0 : index
    %102 = vector.load %arg15[%c0_58, %c0_59, %c0_60] : memref<4x8x8xbf16, #tpu.memory_space<vmem>>, vector<4x8x8xbf16>
    "tpu.trace_start"() <{level = 10 : i32, message = "hqd,hkd->hqk"}> : () -> ()
    %cst_61 = arith.constant dense<0.000000e+00> : vector<4x8x8xf32>
    %103 = tpu.matmul %102, %100, %cst_61 {dimension_numbers = #tpu.dot_dimension_numbers<[2], [2], [1], [1], [0, 0, 0, 1, 1, 1], [0], [0]>} : vector<4x8x8xbf16>, vector<4x8x8xbf16>, vector<4x8x8xf32> -> vector<4x8x8xf32>
    "tpu.trace_stop"() : () -> ()
    %104 = tpu.iota {dimensions = array<i32: 0>} : vector<8x8xi32>
    %c0_i32 = arith.constant 0 : i32
    %105 = vector.broadcast %c0_i32 : i32 to vector<8x8xi32>
    %106 = arith.addi %104, %105 : vector<8x8xi32>
    %107 = tpu.iota {dimensions = array<i32: 1>} : vector<8x8xi32>
    %108 = arith.cmpi sle, %107, %106 : vector<8x8xi32>
    %109 = vector.shape_cast %108 : vector<8x8xi1> to vector<1x8x8xi1>
    %cst_62 = arith.constant -1.000000e+30 : f32
    %110 = vector.shape_cast %109 : vector<1x8x8xi1> to vector<1x8x8xi1>
    %111 = vector.broadcast %110 : vector<1x8x8xi1> to vector<4x8x8xi1>
    %112 = vector.broadcast %cst_62 : f32 to vector<4x8x8xf32>
    %113 = arith.select %111, %103, %112 : vector<4x8x8xi1>, vector<4x8x8xf32>
    %cst_63 = arith.constant dense<0xFF800000> : vector<4x8xf32>
    %114 = vector.multi_reduction <maximumf>, %113, %cst_63 [2] : vector<4x8x8xf32> to vector<4x8xf32>
    %115 = vector.shape_cast %114 : vector<4x8xf32> to vector<4x8x1xf32>
    %116 = vector.broadcast %115 : vector<4x8x1xf32> to vector<4x8x8xf32>
    %117 = arith.subf %113, %116 : vector<4x8x8xf32>
    %118 = math.exp %117 : vector<4x8x8xf32>
    %cst_64 = arith.constant dense<0.000000e+00> : vector<4x8xf32>
    %119 = vector.multi_reduction <add>, %118, %cst_64 [2] : vector<4x8x8xf32> to vector<4x8xf32>
    %120 = vector.shape_cast %119 : vector<4x8xf32> to vector<4x8x1xf32>
    %121 = vector.broadcast %120 : vector<4x8x1xf32> to vector<4x8x8xf32>
    %122 = arith.divf %118, %121 : vector<4x8x8xf32>
    %123 = arith.truncf %122 : vector<4x8x8xf32> to vector<4x8x8xbf16>
    "tpu.trace_start"() <{level = 10 : i32, message = "hqk,hkd->hqd"}> : () -> ()
    %cst_65 = arith.constant dense<0.000000e+00> : vector<4x8x8xf32>
    %124 = tpu.matmul %123, %101, %cst_65 {dimension_numbers = #tpu.dot_dimension_numbers<[2], [1], [1], [2], [0, 0, 0, 1, 1, 2], [0], [0]>} : vector<4x8x8xbf16>, vector<4x8x8xbf16>, vector<4x8x8xf32> -> vector<4x8x8xf32>
    "tpu.trace_stop"() : () -> ()
    %125 = vector.extract_strided_slice %124 {offsets = [0, 0, 0], sizes = [1, 8, 8], strides = [1, 1, 1]} : vector<4x8x8xf32> to vector<1x8x8xf32>
    %126 = vector.shape_cast %125 : vector<1x8x8xf32> to vector<8x8xf32>
    %c0_66 = arith.constant 0 : index
    %c0_67 = arith.constant 0 : index
    %127 = vector.load %arg18[%c0_66, %c0_67] : memref<8x32xf32, #tpu.memory_space<vmem>>, vector<8x8xf32>
    tpu.vector_store %arg18[%c0_66, %c0_67], %126 {strides = array<i32>} : memref<8x32xf32, #tpu.memory_space<vmem>>, vector<8x8xf32>,
    %128 = vector.extract_strided_slice %124 {offsets = [1, 0, 0], sizes = [1, 8, 8], strides = [1, 1, 1]} : vector<4x8x8xf32> to vector<1x8x8xf32>
    %129 = vector.shape_cast %128 : vector<1x8x8xf32> to vector<8x8xf32>
    %c0_68 = arith.constant 0 : index
    %c8 = arith.constant 8 : index
    %130 = vector.load %arg18[%c0_68, %c8] : memref<8x32xf32, #tpu.memory_space<vmem>>, vector<8x8xf32>
    tpu.vector_store %arg18[%c0_68, %c8], %129 {strides = array<i32>} : memref<8x32xf32, #tpu.memory_space<vmem>>, vector<8x8xf32>,
    %131 = vector.extract_strided_slice %124 {offsets = [2, 0, 0], sizes = [1, 8, 8], strides = [1, 1, 1]} : vector<4x8x8xf32> to vector<1x8x8xf32>
    %132 = vector.shape_cast %131 : vector<1x8x8xf32> to vector<8x8xf32>
    %c0_69 = arith.constant 0 : index
    %c16 = arith.constant 16 : index
    %133 = vector.load %arg18[%c0_69, %c16] : memref<8x32xf32, #tpu.memory_space<vmem>>, vector<8x8xf32>
    tpu.vector_store %arg18[%c0_69, %c16], %132 {strides = array<i32>} : memref<8x32xf32, #tpu.memory_space<vmem>>, vector<8x8xf32>,
    %134 = vector.extract_strided_slice %124 {offsets = [3, 0, 0], sizes = [1, 8, 8], strides = [1, 1, 1]} : vector<4x8x8xf32> to vector<1x8x8xf32>
    %135 = vector.shape_cast %134 : vector<1x8x8xf32> to vector<8x8xf32>
    %c0_70 = arith.constant 0 : index
    %c24 = arith.constant 24 : index
    %136 = vector.load %arg18[%c0_70, %c24] : memref<8x32xf32, #tpu.memory_space<vmem>>, vector<8x8xf32>
    tpu.vector_store %arg18[%c0_70, %c24], %135 {strides = array<i32>} : memref<8x32xf32, #tpu.memory_space<vmem>>, vector<8x8xf32>,
    %c0_71 = arith.constant 0 : index
    %c0_72 = arith.constant 0 : index
    %137 = vector.load %arg18[%c0_71, %c0_72] : memref<8x32xf32, #tpu.memory_space<vmem>>, vector<8x32xf32>
    %138 = arith.truncf %137 : vector<8x32xf32> to vector<8x32xbf16>
    %c0_73 = arith.constant 0 : index
    %c0_74 = arith.constant 0 : index
    %139 = vector.load %arg6[%c0_73, %c0_74] : memref<32x32xbf16, #tpu.memory_space<vmem>>, vector<32x32xbf16>
    %cst_75 = arith.constant dense<0.000000e+00> : vector<8x32xf32>
    %140 = tpu.matmul %138, %139, %cst_75 {dimension_numbers = #tpu.dot_dimension_numbers<[1], [0], [0], [1], [0, 0, 1, 1], [], []>} : vector<8x32xbf16>, vector<32x32xbf16>, vector<8x32xf32> -> vector<8x32xf32>
    %c0_76 = arith.constant 0 : index
    %c0_77 = arith.constant 0 : index
    %141 = vector.load %arg7[%c0_76, %c0_77] : memref<1x32xf32, #tpu.memory_space<vmem>>, vector<1x32xf32>
    %142 = vector.broadcast %141 : vector<1x32xf32> to vector<8x32xf32>
    %143 = arith.addf %140, %142 : vector<8x32xf32>
    %144 = arith.addf %1, %143 : vector<8x32xf32>
    %c0_78 = arith.constant 0 : index
    %c0_79 = arith.constant 0 : index
    %145 = vector.load %arg8[%c0_78, %c0_79] : memref<1x32xf32, #tpu.memory_space<vmem>>, vector<1x32xf32>
    %c0_80 = arith.constant 0 : index
    %c0_81 = arith.constant 0 : index
    %146 = vector.load %arg9[%c0_80, %c0_81] : memref<1x32xf32, #tpu.memory_space<vmem>>, vector<1x32xf32>
    %cst_82 = arith.constant dense<0.000000e+00> : vector<8xf32>
    %147 = vector.multi_reduction <add>, %144, %cst_82 [1] : vector<8x32xf32> to vector<8xf32>
    %148 = vector.shape_cast %147 : vector<8xf32> to vector<8x1xf32>
    %cst_83 = arith.constant 3.200000e+01 : f32
    %149 = vector.broadcast %cst_83 : f32 to vector<8x1xf32>
    %150 = arith.divf %148, %149 : vector<8x1xf32>
    %151 = vector.broadcast %150 : vector<8x1xf32> to vector<8x32xf32>
    %152 = arith.subf %144, %151 : vector<8x32xf32>
    %153 = arith.mulf %152, %152 : vector<8x32xf32>
    %cst_84 = arith.constant dense<0.000000e+00> : vector<8xf32>
    %154 = vector.multi_reduction <add>, %153, %cst_84 [1] : vector<8x32xf32> to vector<8xf32>
    %155 = vector.shape_cast %154 : vector<8xf32> to vector<8x1xf32>
    %cst_85 = arith.constant 3.200000e+01 : f32
    %156 = vector.broadcast %cst_85 : f32 to vector<8x1xf32>
    %157 = arith.divf %155, %156 : vector<8x1xf32>
    %158 = vector.broadcast %150 : vector<8x1xf32> to vector<8x32xf32>
    %159 = arith.subf %144, %158 : vector<8x32xf32>
    %cst_86 = arith.constant 9.99999974E-6 : f32
    %160 = vector.broadcast %cst_86 : f32 to vector<8x1xf32>
    %161 = arith.addf %157, %160 : vector<8x1xf32>
    %162 = math.rsqrt %161 : vector<8x1xf32>
    %163 = vector.broadcast %162 : vector<8x1xf32> to vector<8x32xf32>
    %164 = arith.mulf %159, %163 : vector<8x32xf32>
    %165 = vector.broadcast %145 : vector<1x32xf32> to vector<8x32xf32>
    %166 = arith.mulf %164, %165 : vector<8x32xf32>
    %167 = vector.broadcast %146 : vector<1x32xf32> to vector<8x32xf32>
    %168 = arith.addf %166, %167 : vector<8x32xf32>
    %169 = arith.truncf %168 : vector<8x32xf32> to vector<8x32xbf16>
    %cst_87 = arith.constant 0.000000e+00 : f32
    %170 = vector.broadcast %cst_87 : f32 to vector<8x32xf32>
    %c0_88 = arith.constant 0 : index
    %c0_89 = arith.constant 0 : index
    %171 = vector.load %arg10[%c0_88, %c0_89] : memref<32x64xbf16, #tpu.memory_space<vmem>>, vector<32x64xbf16>
    %cst_90 = arith.constant dense<0.000000e+00> : vector<8x64xf32>
    %172 = tpu.matmul %169, %171, %cst_90 {dimension_numbers = #tpu.dot_dimension_numbers<[1], [0], [0], [1], [0, 0, 1, 1], [], []>} : vector<8x32xbf16>, vector<32x64xbf16>, vector<8x64xf32> -> vector<8x64xf32>
    %c0_91 = arith.constant 0 : index
    %c0_92 = arith.constant 0 : index
    %173 = vector.load %arg11[%c0_91, %c0_92] : memref<1x64xf32, #tpu.memory_space<vmem>>, vector<1x64xf32>
    %174 = vector.broadcast %173 : vector<1x64xf32> to vector<8x64xf32>
    %175 = arith.addf %172, %174 : vector<8x64xf32>
    %cst_93 = arith.constant 5.000000e-01 : f32
    %176 = vector.broadcast %cst_93 : f32 to vector<8x64xf32>
    %177 = arith.mulf %176, %175 : vector<8x64xf32>
    %cst_94 = arith.constant 4.471500e-02 : f32
    %178 = vector.broadcast %cst_94 : f32 to vector<8x64xf32>
    %179 = arith.mulf %178, %175 : vector<8x64xf32>
    %180 = arith.mulf %179, %175 : vector<8x64xf32>
    %181 = arith.mulf %180, %175 : vector<8x64xf32>
    %182 = arith.addf %175, %181 : vector<8x64xf32>
    %cst_95 = arith.constant 0.797884583 : f32
    %183 = vector.broadcast %cst_95 : f32 to vector<8x64xf32>
    %184 = arith.mulf %183, %182 : vector<8x64xf32>
    %185 = math.tanh %184 : vector<8x64xf32>
    %cst_96 = arith.constant 1.000000e+00 : f32
    %186 = vector.broadcast %cst_96 : f32 to vector<8x64xf32>
    %187 = arith.addf %186, %185 : vector<8x64xf32>
    %188 = arith.mulf %177, %187 : vector<8x64xf32>
    %189 = arith.truncf %188 : vector<8x64xf32> to vector<8x64xbf16>
    %c0_97 = arith.constant 0 : index
    %c0_98 = arith.constant 0 : index
    %190 = vector.load %arg12[%c0_97, %c0_98] : memref<64x32xbf16, #tpu.memory_space<vmem>>, vector<64x32xbf16>
    %cst_99 = arith.constant dense<0.000000e+00> : vector<8x32xf32>
    %191 = tpu.matmul %189, %190, %cst_99 {dimension_numbers = #tpu.dot_dimension_numbers<[1], [0], [0], [1], [0, 0, 1, 1], [], []>} : vector<8x64xbf16>, vector<64x32xbf16>, vector<8x32xf32> -> vector<8x32xf32>
    %192 = arith.addf %170, %191 : vector<8x32xf32>
    %193 = arith.addf %144, %192 : vector<8x32xf32>
    %c0_100 = arith.constant 0 : index
    %c0_101 = arith.constant 0 : index
    %194 = vector.load %arg13[%c0_100, %c0_101] : memref<1x32xf32, #tpu.memory_space<vmem>>, vector<1x32xf32>
    %195 = vector.broadcast %194 : vector<1x32xf32> to vector<8x32xf32>
    %196 = arith.addf %193, %195 : vector<8x32xf32>
    %c0_102 = arith.constant 0 : index
    %c0_103 = arith.constant 0 : index
    %c0_104 = arith.constant 0 : index
    %197 = vector.load %arg14[%c0_102, %c0_103, %c0_104] : memref<1x8x32xf32, #tpu.memory_space<vmem>>, vector<1x8x32xf32>
    %198 = vector.shape_cast %197 : vector<1x8x32xf32> to vector<8x32xf32>
    %199 = vector.shape_cast %196 : vector<8x32xf32> to vector<1x8x32xf32>
    tpu.vector_store %arg14[%c0_102, %c0_103, %c0_104], %199 {strides = array<i32>} : memref<1x8x32xf32, #tpu.memory_space<vmem>>, vector<1x8x32xf32>,
    return
  }
  func.func @transform_0(%arg0: i32) -> (i32, i32, i32) {
    %c0_i32 = arith.constant 0 : i32
    %c0_i32_0 = arith.constant 0 : i32
    %c0_i32_1 = arith.constant 0 : i32
    return %arg0, %c0_i32, %c0_i32_0 : i32, i32, i32
  }
  func.func @transform_1(%arg0: i32) -> (i32, i32) {
    %c0_i32 = arith.constant 0 : i32
    %c0_i32_0 = arith.constant 0 : i32
    %c0_i32_1 = arith.constant 0 : i32
    return %c0_i32, %c0_i32_0 : i32, i32
  }
  func.func @transform_2(%arg0: i32) -> (i32, i32) {
    %c0_i32 = arith.constant 0 : i32
    %c0_i32_0 = arith.constant 0 : i32
    %c0_i32_1 = arith.constant 0 : i32
    return %c0_i32, %c0_i32_0 : i32, i32
  }
  func.func @transform_3(%arg0: i32) -> (i32, i32) {
    %c0_i32 = arith.constant 0 : i32
    %c0_i32_0 = arith.constant 0 : i32
    %c0_i32_1 = arith.constant 0 : i32
    return %c0_i32, %c0_i32_0 : i32, i32
  }
  func.func @transform_4(%arg0: i32) -> (i32, i32) {
    %c0_i32 = arith.constant 0 : i32
    %c0_i32_0 = arith.constant 0 : i32
    %c0_i32_1 = arith.constant 0 : i32
    return %c0_i32, %c0_i32_0 : i32, i32
  }
  func.func @transform_5(%arg0: i32) -> (i32, i32) {
    %c0_i32 = arith.constant 0 : i32
    %c0_i32_0 = arith.constant 0 : i32
    %c0_i32_1 = arith.constant 0 : i32
    return %c0_i32, %c0_i32_0 : i32, i32
  }
  func.func @transform_6(%arg0: i32) -> (i32, i32) {
    %c0_i32 = arith.constant 0 : i32
    %c0_i32_0 = arith.constant 0 : i32
    %c0_i32_1 = arith.constant 0 : i32
    return %c0_i32, %c0_i32_0 : i32, i32
  }
  func.func @transform_7(%arg0: i32) -> (i32, i32) {
    %c0_i32 = arith.constant 0 : i32
    %c0_i32_0 = arith.constant 0 : i32
    %c0_i32_1 = arith.constant 0 : i32
    return %c0_i32, %c0_i32_0 : i32, i32
  }
  func.func @transform_8(%arg0: i32) -> (i32, i32) {
    %c0_i32 = arith.constant 0 : i32
    %c0_i32_0 = arith.constant 0 : i32
    %c0_i32_1 = arith.constant 0 : i32
    return %c0_i32, %c0_i32_0 : i32, i32
  }
  func.func @transform_9(%arg0: i32) -> (i32, i32) {
    %c0_i32 = arith.constant 0 : i32
    %c0_i32_0 = arith.constant 0 : i32
    %c0_i32_1 = arith.constant 0 : i32
    return %c0_i32, %c0_i32_0 : i32, i32
  }
  func.func @transform_10(%arg0: i32) -> (i32, i32) {
    %c0_i32 = arith.constant 0 : i32
    %c0_i32_0 = arith.constant 0 : i32
    %c0_i32_1 = arith.constant 0 : i32
    return %c0_i32, %c0_i32_0 : i32, i32
  }
  func.func @transform_11(%arg0: i32) -> (i32, i32) {
    %c0_i32 = arith.constant 0 : i32
    %c0_i32_0 = arith.constant 0 : i32
    %c0_i32_1 = arith.constant 0 : i32
    return %c0_i32, %c0_i32_0 : i32, i32
  }
  func.func @transform_12(%arg0: i32) -> (i32, i32) {
    %c0_i32 = arith.constant 0 : i32
    %c0_i32_0 = arith.constant 0 : i32
    %c0_i32_1 = arith.constant 0 : i32
    return %c0_i32, %c0_i32_0 : i32, i32
  }
  func.func @transform_13(%arg0: i32) -> (i32, i32, i32) {
    %c0_i32 = arith.constant 0 : i32
    %c0_i32_0 = arith.constant 0 : i32
    %c0_i32_1 = arith.constant 0 : i32
    return %arg0, %c0_i32, %c0_i32_0 : i32, i32, i32
  }
}

</mosaic_0001>

<llo_original>
// kernel: tpu_custom_call.1
$region0: #{tpu_custom_call.1}
  #allocation0 [shape = 'u32[]', space=smem, size = 0x4, offset = 0x4, fixed_abs, tag = 'smem constant byte address 0x4 - core index']
  #allocation1 [shape = 'u32[144,128]{1,0:T(1,128)}', space=vmem, size = 0x12000, scoped, tag = 'internal scratch']
  %s0 = inlined_call_operand.hbm [shape: f32[8,128], index: 0, kind: input, shape index: {}]
  %s1 = inlined_call_operand.hbm [shape: f32[8,128], index: 1, kind: output, shape index: {}]
  %s2 = sld [smem:[#allocation0]]
  $region18: #{tpu_custom_call.1} parent=0
    _
  %s4 = ssub.s32 1, %s2
  %s5 = scalar_select 0, %s4, %s2
  $region1: #{tpu_custom_call.1} parent=0
    #allocation2 [shape = 'u8[4096]{0}', space=vmem, size = 0x1000, scoped, tag = 'input window, operand 0, single buffered']
    #allocation3 [shape = 's32[1]{0}', space=sflag, size = 0x4, scoped, tag = 'scoped memory for tpu_custom_call.1']
    #allocation4 [shape = 's32[1]{0}', space=sflag, size = 0x4, scoped, tag = 'scoped memory for tpu_custom_call.1']
    #allocation5 [shape = 'u8[4096]{0}', space=vmem, size = 0x1000, scoped, tag = 'output window, operand 0, single buffered']
    %6 = vsyncpa [#allocation3], 0
    %7 = vsyncpa [#allocation4], 0
    // Predicated region
    $region2: #{tpu_custom_call.1} parent=1 // pred_check
      _
    $region3: #{tpu_custom_call.1} parent=1 // pred_check_branch
      %9 = sbr.rel (0) target = $region5
    $region4: #{tpu_custom_call.1} parent=1 // pred_region
      %s11 = ssub.s32 128, 128
      %12 = vsyncadd [#allocation3], %s11
      %s14 = sshll.u32 [#allocation2], 4
      %s15 = int_to_ptr.vmem [resolvable:$true] %s14
      %17 = dma.hbm_to_vmem [thread:$0]  %s0, 128, %s15, [#allocation3]
    $region5: #{tpu_custom_call.1} parent=1 // pred_fallthru
      _
    // Predicated region
    $region6: #{tpu_custom_call.1} parent=1 // pred_check
      _
    $region7: #{tpu_custom_call.1} parent=1 // pred_check_branch
      %19 = sbr.rel (0) target = $region9
    $region8: #{tpu_custom_call.1} parent=1 // pred_region
      %20 = dma.done [#allocation3], 128
    $region9: #{tpu_custom_call.1} parent=1 // pred_fallthru
      _
    %v21 = vld [vmem:[#allocation2] sm:$0xff]
    %v22 = vadd.f32 %v21, 1.0
    %23 = vst [vmem:[#allocation5] sm:$0xff] %v22
    // Predicated region
    $region10: #{tpu_custom_call.1} parent=1 // pred_check
      _
    $region11: #{tpu_custom_call.1} parent=1 // pred_check_branch
      %25 = sbr.rel (0) target = $region13
    $region12: #{tpu_custom_call.1} parent=1 // pred_region
      %s27 = ssub.s32 128, 128
      %28 = vsyncadd [#allocation4], %s27
      %s30 = sshll.u32 [#allocation5], 4
      %s31 = int_to_ptr.vmem [resolvable:$true] %s30
      %33 = dma.vmem_to_hbm [thread:$0]  %s31, 128, %s1, [#allocation4]
    $region13: #{tpu_custom_call.1} parent=1 // pred_fallthru
      _
    // Predicated region
    $region14: #{tpu_custom_call.1} parent=1 // pred_check
      _
    $region15: #{tpu_custom_call.1} parent=1 // pred_check_branch
      %35 = sbr.rel (0) target = $region17
    $region16: #{tpu_custom_call.1} parent=1 // pred_region
      %36 = dma.done [#allocation4], 128
    $region17: #{tpu_custom_call.1} parent=1 // pred_fallthru
      _
    %37 = vsyncpa [#allocation3], 1
    %38 = vsyncpa [#allocation4], 1

// kernel: tpu_custom_call.1
$region0: #{tpu_custom_call.1}
  #allocation0 [shape = 'u32[]', space=smem, size = 0x4, offset = 0x4, fixed_abs, tag = 'smem constant byte address 0x4 - core index']
  #allocation1 [shape = 'u32[144,128]{1,0:T(1,128)}', space=vmem, size = 0x12000, scoped, tag = 'internal scratch']
  #allocation2 [shape = 'bf16[4,8,8]{2,1,0:T(8,128)(2,1)}', space=vmem, size = 0x2000, scoped, tag = 'scratch operand']
  #allocation3 [shape = 'bf16[4,8,8]{2,1,0:T(8,128)(2,1)}', space=vmem, size = 0x2000, scoped, tag = 'scratch operand']
  #allocation4 [shape = 'bf16[4,8,8]{2,1,0:T(8,128)(2,1)}', space=vmem, size = 0x2000, scoped, tag = 'scratch operand']
  #allocation5 [shape = 'f32[8,32]{1,0:T(8,128)}', space=vmem, size = 0x1000, scoped, tag = 'scratch operand']
  %s0 = inlined_call_operand.vmem [shape: f32[2,8,32], index: 0, kind: input, shape index: {}]
  %s1 = inlined_call_operand.vmem [shape: f32[1,32], index: 1, kind: input, shape index: {}]
  %s2 = inlined_call_operand.vmem [shape: f32[1,32], index: 2, kind: input, shape index: {}]
  %s3 = inlined_call_operand.vmem [shape: bf16[32,96], index: 3, kind: input, shape index: {}]
  %s4 = inlined_call_operand.hbm [shape: f32[1,96], index: 4, kind: input, shape index: {}]
  %s5 = inlined_call_operand.vmem [shape: bf16[32,32], index: 5, kind: input, shape index: {}]
  %s6 = inlined_call_operand.hbm [shape: f32[1,32], index: 6, kind: input, shape index: {}]
  %s7 = inlined_call_operand.hbm [shape: f32[1,32], index: 7, kind: input, shape index: {}]
  %s8 = inlined_call_operand.hbm [shape: f32[1,32], index: 8, kind: input, shape index: {}]
  %s9 = inlined_call_operand.vmem [shape: bf16[32,64], index: 9, kind: input, shape index: {}]
  %s10 = inlined_call_operand.vmem [shape: f32[1,64], index: 10, kind: input, shape index: {}]
  %s11 = inlined_call_operand.vmem [shape: bf16[64,32], index: 11, kind: input, shape index: {}]
  %s12 = inlined_call_operand.vmem [shape: f32[1,32], index: 12, kind: input, shape index: {}]
  %s13 = inlined_call_operand.hbm [shape: f32[2,8,32], index: 13, kind: output, shape index: {}]
  %s14 = sld [smem:[#allocation0]]
  $region101: #{tpu_custom_call.1} parent=0
    _
  %s16 = ssub.s32 1, %s14
  %s17 = scalar_select 0, %s16, %s14
  $region1: #{tpu_custom_call.1} parent=0
    #allocation6 [shape = 'u8[512]{0}', space=vmem, size = 0x400, scoped, tag = 'input window, operand 4, single buffered']
    #allocation7 [shape = 's32[2]{0}', space=sflag, size = 0x8, scoped, tag = 'scoped memory for tpu_custom_call.1']
    #allocation8 [shape = 's32[2]{0}', space=sflag, size = 0x8, scoped, tag = 'scoped memory for tpu_custom_call.1']
    #allocation9 [shape = 'u8[512]{0}', space=vmem, size = 0x400, scoped, tag = 'input window, operand 6, single buffered']
    #allocation10 [shape = 's32[1]{0}', space=sflag, size = 0x4, scoped, tag = 'scoped memory for tpu_custom_call.1']
    #allocation11 [shape = 'u8[512]{0}', space=vmem, size = 0x400, scoped, tag = 'input window, operand 7, single buffered']
    #allocation12 [shape = 'u8[512]{0}', space=vmem, size = 0x400, scoped, tag = 'input window, operand 8, single buffered']
    #allocation13 [shape = 's32[1]{0}', space=sflag, size = 0x4, scoped, tag = 'scoped memory for tpu_custom_call.1']
    #allocation14 [shape = 'u8[8192]{0}', space=vmem, size = 0x2000, scoped, tag = 'output window, operand 0']
    %18 = vsyncpa [#allocation7], 0
    %19 = vsyncpa [#allocation10], 0
    %20 = vsyncpa [#allocation13], 0
    %21 = vsyncpa [#allocation8], 0
    %s22 = scalar_lea.sflag [#allocation8], 1
    %23 = vsyncpa %s22, 0
    loop: start=0, step=1, limit=4
    $region2: #{tpu_custom_call.1} parent=1 // loop_pre_header
      _
    $region3: #{tpu_custom_call.1} parent=1 // loop_header
      %s25 = sphi 0, %s29
      %p26 = scmp.ge.s32.totalorder %s25, 4
      %s35 = sphi 0, %s37
      %s38 = sphi 0, %s35
      %s39 = sphi 0, %s38
      %s55 = sphi 0, %s39
      %s59 = sphi 0, %s59
      %s61 = sphi 0, %s59
      %s62 = sphi 0, %s61
      %s76 = sphi 0, %s62
      %s80 = sphi 0, %s80
      %s82 = sphi 0, %s80
      %s83 = sphi 0, %s82
      %s97 = sphi 0, %s83
      %s101 = sphi 0, %s101
      %s103 = sphi 0, %s101
      %s104 = sphi 0, %s103
      %s118 = sphi 0, %s104
      %s122 = sphi 0, %s122
      %s124 = sphi 0, %s122
      %s125 = sphi 0, %s124
      %s139 = sphi 0, %s125
      %s143 = sphi 0, %s143
      %s145 = sphi 0, %s143
      %s146 = sphi 0, %s145
      %s160 = sphi 0, %s146
      %s164 = sphi 0, %s164
      %s166 = sphi 0, %s164
      %s167 = sphi 0, %s166
      %s181 = sphi 0, %s167
      %s185 = sphi 0, %s185
      %s187 = sphi 0, %s185
      %s188 = sphi 0, %s187
      %s202 = sphi 0, %s188
      %s206 = sphi 0, %s206
      %s208 = sphi 0, %s206
      %s209 = sphi 0, %s208
      %s223 = sphi 0, %s209
      %s227 = sphi 0, %s227
      %s229 = sphi 0, %s227
      %s230 = sphi 0, %s229
      %s244 = sphi 0, %s230
      %s248 = sphi 0, %s248
      %s250 = sphi 0, %s248
      %s251 = sphi 0, %s250
      %s265 = sphi 0, %s251
      %s269 = sphi 0, %s269
      %s271 = sphi 0, %s269
      %s272 = sphi 0, %s271
      %s286 = sphi 0, %s272
      %s290 = sphi 0, %s290
      %s292 = sphi 0, %s290
      %s293 = sphi 0, %s292
      %s307 = sphi 0, %s293
      %s313 = sphi 0, %s315
      %s316 = sphi 0, %s313
      %s317 = sphi 0, %s316
      %s333 = sphi 0, %s317
    $region4: #{tpu_custom_call.1} parent=1 // loop_header_branch
      %28 = sbr.rel (%p26) target = $region8
    $region5: #{tpu_custom_call.1} parent=1 // loop_body
      %s30 = ssub.s32 %s25, 1
      %s31 = ssub.s32 %s25, 2
      %s32 = sadd.s32 %s25, 1
      %s33 = ssub.s32 %s25, %s32
      %p34 = scmp.eq.s32.totalorder %s33, 0
      %s36 = sadd.s32 %s35, 1
      %s37 = scalar_select %p34, %s35, %s36
      %p40 = pneg %p34
      %p41 = scmp.eq.s32.totalorder %s25, 1
      %p42 = por %p40, %p41
      %p43 = scmp.ne.s32.totalorder %s35, %s38
      %p44 = scmp.eq.s32.totalorder %s25, 0
      %p45 = por %p43, %p44
      %p46 = scmp.ne.s32.totalorder %s35, %s38
      %p47 = scmp.eq.s32.totalorder %s30, 1
      %p48 = por %p46, %p47
      %p49 = scmp.ne.s32.totalorder %s38, %s39
      %p50 = scmp.eq.s32.totalorder %s30, 0
      %p51 = por %p49, %p50
      %p52 = scmp.ne.s32.totalorder %s38, %s39
      %p53 = scmp.eq.s32.totalorder %s31, 1
      %p54 = por %p52, %p53
      %p56 = scmp.ne.s32.totalorder %s39, %s55
      %p57 = scmp.eq.s32.totalorder %s31, 0
      %p58 = por %p56, %p57
      %s60 = sadd.s32 %s59, 1
      %p63 = scmp.eq.s32.totalorder %s25, 1
      %p64 = scmp.ne.s32.totalorder %s59, %s61
      %p65 = scmp.eq.s32.totalorder %s25, 0
      %p66 = por %p64, %p65
      %p67 = scmp.ne.s32.totalorder %s59, %s61
      %p68 = scmp.eq.s32.totalorder %s30, 1
      %p69 = por %p67, %p68
      %p70 = scmp.ne.s32.totalorder %s61, %s62
      %p71 = scmp.eq.s32.totalorder %s30, 0
      %p72 = por %p70, %p71
      %p73 = scmp.ne.s32.totalorder %s61, %s62
      %p74 = scmp.eq.s32.totalorder %s31, 1
      %p75 = por %p73, %p74
      %p77 = scmp.ne.s32.totalorder %s62, %s76
      %p78 = scmp.eq.s32.totalorder %s31, 0
      %p79 = por %p77, %p78
      %s81 = sadd.s32 %s80, 1
      %p84 = scmp.eq.s32.totalorder %s25, 1
      %p85 = scmp.ne.s32.totalorder %s80, %s82
      %p86 = scmp.eq.s32.totalorder %s25, 0
      %p87 = por %p85, %p86
      %p88 = scmp.ne.s32.totalorder %s80, %s82
      %p89 = scmp.eq.s32.totalorder %s30, 1
      %p90 = por %p88, %p89
      %p91 = scmp.ne.s32.totalorder %s82, %s83
      %p92 = scmp.eq.s32.totalorder %s30, 0
      %p93 = por %p91, %p92
      %p94 = scmp.ne.s32.totalorder %s82, %s83
      %p95 = scmp.eq.s32.totalorder %s31, 1
      %p96 = por %p94, %p95
      %p98 = scmp.ne.s32.totalorder %s83, %s97
      %p99 = scmp.eq.s32.totalorder %s31, 0
      %p100 = por %p98, %p99
      %s102 = sadd.s32 %s101, 1
      %p105 = scmp.eq.s32.totalorder %s25, 1
      %p106 = scmp.ne.s32.totalorder %s101, %s103
      %p107 = scmp.eq.s32.totalorder %s25, 0
      %p108 = por %p106, %p107
      %p109 = scmp.ne.s32.totalorder %s101, %s103
      %p110 = scmp.eq.s32.totalorder %s30, 1
      %p111 = por %p109, %p110
      %p112 = scmp.ne.s32.totalorder %s103, %s104
      %p113 = scmp.eq.s32.totalorder %s30, 0
      %p114 = por %p112, %p113
      %p115 = scmp.ne.s32.totalorder %s103, %s104
      %p116 = scmp.eq.s32.totalorder %s31, 1
      %p117 = por %p115, %p116
      %p119 = scmp.ne.s32.totalorder %s104, %s118
      %p120 = scmp.eq.s32.totalorder %s31, 0
      %p121 = por %p119, %p120
      %s123 = sadd.s32 %s122, 1
      %p126 = scmp.eq.s32.totalorder %s25, 1
      %p127 = scmp.ne.s32.totalorder %s122, %s124
      %p128 = scmp.eq.s32.totalorder %s25, 0
      %p129 = por %p127, %p128
      %p130 = scmp.ne.s32.totalorder %s122, %s124
      %p131 = scmp.eq.s32.totalorder %s30, 1
      %p132 = por %p130, %p131
      %p133 = scmp.ne.s32.totalorder %s124, %s125
      %p134 = scmp.eq.s32.totalorder %s30, 0
      %p135 = por %p133, %p134
      %p136 = scmp.ne.s32.totalorder %s124, %s125
      %p137 = scmp.eq.s32.totalorder %s31, 1
      %p138 = por %p136, %p137
      %p140 = scmp.ne.s32.totalorder %s125, %s139
      %p141 = scmp.eq.s32.totalorder %s31, 0
      %p142 = por %p140, %p141
      %s144 = sadd.s32 %s143, 1
      %p147 = scmp.eq.s32.totalorder %s25, 1
      %p148 = scmp.ne.s32.totalorder %s143, %s145
      %p149 = scmp.eq.s32.totalorder %s25, 0
      %p150 = por %p148, %p149
      %p151 = scmp.ne.s32.totalorder %s143, %s145
      %p152 = scmp.eq.s32.totalorder %s30, 1
      %p153 = por %p151, %p152
      %p154 = scmp.ne.s32.totalorder %s145, %s146
      %p155 = scmp.eq.s32.totalorder %s30, 0
      %p156 = por %p154, %p155
      %p157 = scmp.ne.s32.totalorder %s145, %s146
      %p158 = scmp.eq.s32.totalorder %s31, 1
      %p159 = por %p157, %p158
      %p161 = scmp.ne.s32.totalorder %s146, %s160
      %p162 = scmp.eq.s32.totalorder %s31, 0
      %p163 = por %p161, %p162
      %s165 = sadd.s32 %s164, 1
      %p168 = scmp.eq.s32.totalorder %s25, 1
      %p169 = scmp.ne.s32.totalorder %s164, %s166
      %p170 = scmp.eq.s32.totalorder %s25, 0
      %p171 = por %p169, %p170
      %p172 = scmp.ne.s32.totalorder %s164, %s166
      %p173 = scmp.eq.s32.totalorder %s30, 1
      %p174 = por %p172, %p173
      %p175 = scmp.ne.s32.totalorder %s166, %s167
      %p176 = scmp.eq.s32.totalorder %s30, 0
      %p177 = por %p175, %p176
      %p178 = scmp.ne.s32.totalorder %s166, %s167
      %p179 = scmp.eq.s32.totalorder %s31, 1
      %p180 = por %p178, %p179
      %p182 = scmp.ne.s32.totalorder %s167, %s181
      %p183 = scmp.eq.s32.totalorder %s31, 0
      %p184 = por %p182, %p183
      %s186 = sadd.s32 %s185, 1
      %p189 = scmp.eq.s32.totalorder %s25, 1
      %p190 = scmp.ne.s32.totalorder %s185, %s187
      %p191 = scmp.eq.s32.totalorder %s25, 0
      %p192 = por %p190, %p191
      %p193 = scmp.ne.s32.totalorder %s185, %s187
      %p194 = scmp.eq.s32.totalorder %s30, 1
      %p195 = por %p193, %p194
      %p196 = scmp.ne.s32.totalorder %s187, %s188
      %p197 = scmp.eq.s32.totalorder %s30, 0
      %p198 = por %p196, %p197
      %p199 = scmp.ne.s32.totalorder %s187, %s188
      %p200 = scmp.eq.s32.totalorder %s31, 1
      %p201 = por %p199, %p200
      %p203 = scmp.ne.s32.totalorder %s188, %s202
      %p204 = scmp.eq.s32.totalorder %s31, 0
      %p205 = por %p203, %p204
      %s207 = sadd.s32 %s206, 1
      %p210 = scmp.eq.s32.totalorder %s25, 1
      %p211 = scmp.ne.s32.totalorder %s206, %s208
      %p212 = scmp.eq.s32.totalorder %s25, 0
      %p213 = por %p211, %p212
      %p214 = scmp.ne.s32.totalorder %s206, %s208
      %p215 = scmp.eq.s32.totalorder %s30, 1
      %p216 = por %p214, %p215
      %p217 = scmp.ne.s32.totalorder %s208, %s209
      %p218 = scmp.eq.s32.totalorder %s30, 0
      %p219 = por %p217, %p218
      %p220 = scmp.ne.s32.totalorder %s208, %s209
      %p221 = scmp.eq.s32.totalorder %s31, 1
      %p222 = por %p220, %p221
      %p224 = scmp.ne.s32.totalorder %s209, %s223
      %p225 = scmp.eq.s32.totalorder %s31, 0
      %p226 = por %p224, %p225
      %s228 = sadd.s32 %s227, 1
      %p231 = scmp.eq.s32.totalorder %s25, 1
      %p232 = scmp.ne.s32.totalorder %s227, %s229
      %p233 = scmp.eq.s32.totalorder %s25, 0
      %p234 = por %p232, %p233
      %p235 = scmp.ne.s32.totalorder %s227, %s229
      %p236 = scmp.eq.s32.totalorder %s30, 1
      %p237 = por %p235, %p236
      %p238 = scmp.ne.s32.totalorder %s229, %s230
      %p239 = scmp.eq.s32.totalorder %s30, 0
      %p240 = por %p238, %p239
      %p241 = scmp.ne.s32.totalorder %s229, %s230
      %p242 = scmp.eq.s32.totalorder %s31, 1
      %p243 = por %p241, %p242
      %p245 = scmp.ne.s32.totalorder %s230, %s244
      %p246 = scmp.eq.s32.totalorder %s31, 0
      %p247 = por %p245, %p246
      %s249 = sadd.s32 %s248, 1
      %p252 = scmp.eq.s32.totalorder %s25, 1
      %p253 = scmp.ne.s32.totalorder %s248, %s250
      %p254 = scmp.eq.s32.totalorder %s25, 0
      %p255 = por %p253, %p254
      %p256 = scmp.ne.s32.totalorder %s248, %s250
      %p257 = scmp.eq.s32.totalorder %s30, 1
      %p258 = por %p256, %p257
      %p259 = scmp.ne.s32.totalorder %s250, %s251
      %p260 = scmp.eq.s32.totalorder %s30, 0
      %p261 = por %p259, %p260
      %p262 = scmp.ne.s32.totalorder %s250, %s251
      %p263 = scmp.eq.s32.totalorder %s31, 1
      %p264 = por %p262, %p263
      %p266 = scmp.ne.s32.totalorder %s251, %s265
      %p267 = scmp.eq.s32.totalorder %s31, 0
      %p268 = por %p266, %p267
      %s270 = sadd.s32 %s269, 1
      %p273 = scmp.eq.s32.totalorder %s25, 1
      %p274 = scmp.ne.s32.totalorder %s269, %s271
      %p275 = scmp.eq.s32.totalorder %s25, 0
      %p276 = por %p274, %p275
      %p277 = scmp.ne.s32.totalorder %s269, %s271
      %p278 = scmp.eq.s32.totalorder %s30, 1
      %p279 = por %p277, %p278
      %p280 = scmp.ne.s32.totalorder %s271, %s272
      %p281 = scmp.eq.s32.totalorder %s30, 0
      %p282 = por %p280, %p281
      %p283 = scmp.ne.s32.totalorder %s271, %s272
      %p284 = scmp.eq.s32.totalorder %s31, 1
      %p285 = por %p283, %p284
      %p287 = scmp.ne.s32.totalorder %s272, %s286
      %p288 = scmp.eq.s32.totalorder %s31, 0
      %p289 = por %p287, %p288
      %s291 = sadd.s32 %s290, 1
      %p294 = scmp.eq.s32.totalorder %s25, 1
      %p295 = scmp.ne.s32.totalorder %s290, %s292
      %p296 = scmp.eq.s32.totalorder %s25, 0
      %p297 = por %p295, %p296
      %p298 = scmp.ne.s32.totalorder %s290, %s292
      %p299 = scmp.eq.s32.totalorder %s30, 1
      %p300 = por %p298, %p299
      %p301 = scmp.ne.s32.totalorder %s292, %s293
      %p302 = scmp.eq.s32.totalorder %s30, 0
      %p303 = por %p301, %p302
      %p304 = scmp.ne.s32.totalorder %s292, %s293
      %p305 = scmp.eq.s32.totalorder %s31, 1
      %p306 = por %p304, %p305
      %p308 = scmp.ne.s32.totalorder %s293, %s307
      %p309 = scmp.eq.s32.totalorder %s31, 0
      %p310 = por %p308, %p309
      %s311 = ssub.s32 %s25, %s32
      %p312 = scmp.eq.s32.totalorder %s311, 0
      %s314 = sadd.s32 %s313, 1
      %s315 = scalar_select %p312, %s313, %s314
      %p318 = pneg %p312
      %p319 = scmp.eq.s32.totalorder %s25, 1
      %p320 = por %p318, %p319
      %p321 = scmp.ne.s32.totalorder %s313, %s316
      %p322 = scmp.eq.s32.totalorder %s25, 0
      %p323 = por %p321, %p322
      %p324 = scmp.ne.s32.totalorder %s313, %s316
      %p325 = scmp.eq.s32.totalorder %s30, 1
      %p326 = por %p324, %p325
      %p327 = scmp.ne.s32.totalorder %s316, %s317
      %p328 = scmp.eq.s32.totalorder %s30, 0
      %p329 = por %p327, %p328
      %p330 = scmp.ne.s32.totalorder %s316, %s317
      %p331 = scmp.eq.s32.totalorder %s31, 1
      %p332 = por %p330, %p331
      %p334 = scmp.ne.s32.totalorder %s317, %s333
      %p335 = scmp.eq.s32.totalorder %s31, 0
      %p336 = por %p334, %p335
      %p337 = scmp.le.s32.totalorder 1, %s25
      %p338 = scmp.lt.s32.totalorder %s25, 3
      %p339 = pnand %p337, %p338
      %p340 = pneg %p339
      // Predicated region
      $region9: #{tpu_custom_call.1} parent=5 // pred_check
        _
      $region10: #{tpu_custom_call.1} parent=5 // pred_check_branch
        %342 = sbr.rel (%p339) target = $region12
      $region11: #{tpu_custom_call.1} parent=5 // pred_region
        %s343 = ssub.s32 %s25, 1
        // Predicated region
        $region13: #{tpu_custom_call.1} parent=11 // pred_check
          %p344 = pneg %p72
        $region14: #{tpu_custom_call.1} parent=11 // pred_check_branch
          %346 = sbr.rel (%p344) target = $region16
        $region15: #{tpu_custom_call.1} parent=11 // pred_region
          _
        $region16: #{tpu_custom_call.1} parent=11 // pred_fallthru
          _
        // Predicated region
        $region17: #{tpu_custom_call.1} parent=11 // pred_check
          %p347 = pneg %p93
        $region18: #{tpu_custom_call.1} parent=11 // pred_check_branch
          %349 = sbr.rel (%p347) target = $region20
        $region19: #{tpu_custom_call.1} parent=11 // pred_region
          _
        $region20: #{tpu_custom_call.1} parent=11 // pred_fallthru
          _
        // Predicated region
        $region21: #{tpu_custom_call.1} parent=11 // pred_check
          %p350 = pneg %p114
        $region22: #{tpu_custom_call.1} parent=11 // pred_check_branch
          %352 = sbr.rel (%p350) target = $region24
        $region23: #{tpu_custom_call.1} parent=11 // pred_region
          _
        $region24: #{tpu_custom_call.1} parent=11 // pred_fallthru
          _
        // Predicated region
        $region25: #{tpu_custom_call.1} parent=11 // pred_check
          %p353 = pneg %p135
        $region26: #{tpu_custom_call.1} parent=11 // pred_check_branch
          %355 = sbr.rel (%p353) target = $region28
        $region27: #{tpu_custom_call.1} parent=11 // pred_region
          %s357 = ssub.s32 16, 16
          %358 = vsyncadd [#allocation7], %s357
          %s360 = sshll.u32 [#allocation6], 4
          %s361 = int_to_ptr.vmem [resolvable:$true] %s360
          %363 = dma.hbm_to_vmem [thread:$0]  %s4, 16, %s361, [#allocation7]
        $region28: #{tpu_custom_call.1} parent=11 // pred_fallthru
          _
        // Predicated region
        $region29: #{tpu_custom_call.1} parent=11 // pred_check
          %p364 = pneg %p156
        $region30: #{tpu_custom_call.1} parent=11 // pred_check_branch
          %366 = sbr.rel (%p364) target = $region32
        $region31: #{tpu_custom_call.1} parent=11 // pred_region
          _
        $region32: #{tpu_custom_call.1} parent=11 // pred_fallthru
          _
        // Predicated region
        $region33: #{tpu_custom_call.1} parent=11 // pred_check
          %p367 = pneg %p177
        $region34: #{tpu_custom_call.1} parent=11 // pred_check_branch
          %369 = sbr.rel (%p367) target = $region36
        $region35: #{tpu_custom_call.1} parent=11 // pred_region
          %s371 = ssub.s32 16, 16
          %372 = vsyncadd [#allocation10], %s371
          %s374 = sshll.u32 [#allocation9], 4
          %s375 = int_to_ptr.vmem [resolvable:$true] %s374
          %377 = dma.hbm_to_vmem [thread:$0]  %s6, 16, %s375, [#allocation10]
        $region36: #{tpu_custom_call.1} parent=11 // pred_fallthru
          _
        // Predicated region
        $region37: #{tpu_custom_call.1} parent=11 // pred_check
          %p378 = pneg %p198
        $region38: #{tpu_custom_call.1} parent=11 // pred_check_branch
          %380 = sbr.rel (%p378) target = $region40
        $region39: #{tpu_custom_call.1} parent=11 // pred_region
          %s382 = ssub.s32 16, 16
          %383 = vsyncadd [#allocation10], %s382
          %s385 = sshll.u32 [#allocation11], 4
          %s386 = int_to_ptr.vmem [resolvable:$true] %s385
          %388 = dma.hbm_to_vmem [thread:$0]  %s7, 16, %s386, [#allocation10]
        $region40: #{tpu_custom_call.1} parent=11 // pred_fallthru
          _
        // Predicated region
        $region41: #{tpu_custom_call.1} parent=11 // pred_check
          %p389 = pneg %p219
        $region42: #{tpu_custom_call.1} parent=11 // pred_check_branch
          %391 = sbr.rel (%p389) target = $region44
        $region43: #{tpu_custom_call.1} parent=11 // pred_region
          %s393 = ssub.s32 16, 16
          %394 = vsyncadd [#allocation13], %s393
          %s396 = sshll.u32 [#allocation12], 4
          %s397 = int_to_ptr.vmem [resolvable:$true] %s396
          %399 = dma.hbm_to_vmem [thread:$0]  %s8, 16, %s397, [#allocation13]
        $region44: #{tpu_custom_call.1} parent=11 // pred_fallthru
          _
        // Predicated region
        $region45: #{tpu_custom_call.1} parent=11 // pred_check
          %p400 = pneg %p240
        $region46: #{tpu_custom_call.1} parent=11 // pred_check_branch
          %402 = sbr.rel (%p400) target = $region48
        $region47: #{tpu_custom_call.1} parent=11 // pred_region
          _
        $region48: #{tpu_custom_call.1} parent=11 // pred_fallthru
          _
        // Predicated region
        $region49: #{tpu_custom_call.1} parent=11 // pred_check
          %p403 = pneg %p261
        $region50: #{tpu_custom_call.1} parent=11 // pred_check_branch
          %405 = sbr.rel (%p403) target = $region52
        $region51: #{tpu_custom_call.1} parent=11 // pred_region
          _
        $region52: #{tpu_custom_call.1} parent=11 // pred_fallthru
          _
        // Predicated region
        $region53: #{tpu_custom_call.1} parent=11 // pred_check
          %p406 = pneg %p282
        $region54: #{tpu_custom_call.1} parent=11 // pred_check_branch
          %408 = sbr.rel (%p406) target = $region56
        $region55: #{tpu_custom_call.1} parent=11 // pred_region
          _
        $region56: #{tpu_custom_call.1} parent=11 // pred_fallthru
          _
        // Predicated region
        $region57: #{tpu_custom_call.1} parent=11 // pred_check
          %p409 = pneg %p303
        $region58: #{tpu_custom_call.1} parent=11 // pred_check_branch
          %411 = sbr.rel (%p409) target = $region60
        $region59: #{tpu_custom_call.1} parent=11 // pred_region
          _
        $region60: #{tpu_custom_call.1} parent=11 // pred_fallthru
          _
      $region12: #{tpu_custom_call.1} parent=5 // pred_fallthru
        _
      %p412 = scmp.lt.s32.totalorder %s25, 2
      // Predicated region
      $region61: #{tpu_custom_call.1} parent=5 // pred_check
        %p413 = pneg %p412
      $region62: #{tpu_custom_call.1} parent=5 // pred_check_branch
        %415 = sbr.rel (%p413) target = $region64
      $region63: #{tpu_custom_call.1} parent=5 // pred_region
        // Predicated region
        $region65: #{tpu_custom_call.1} parent=63 // pred_check
          %p416 = pneg %p45
        $region66: #{tpu_custom_call.1} parent=63 // pred_check_branch
          %418 = sbr.rel (%p416) target = $region68
        $region67: #{tpu_custom_call.1} parent=63 // pred_region
          %p419 = scmp.lt.s32.totalorder %s25, 1
          %s420 = scalar_select %p419, %s25, 1
          %s421 = smul.addr %s420, 8
          %s422 = scalar_lea.vmem %s0, %s421
        $region68: #{tpu_custom_call.1} parent=63 // pred_fallthru
          _
      $region64: #{tpu_custom_call.1} parent=5 // pred_fallthru
        _
      %p423 = scmp.le.s32.totalorder 1, %s25
      %p424 = scmp.lt.s32.totalorder %s25, 3
      %p425 = pnand %p423, %p424
      %p426 = pneg %p425
      // Predicated region
      $region69: #{tpu_custom_call.1} parent=5 // pred_check
        _
      $region70: #{tpu_custom_call.1} parent=5 // pred_check_branch
        %428 = sbr.rel (%p425) target = $region72
      $region71: #{tpu_custom_call.1} parent=5 // pred_region
        %s429 = ssub.s32 %s25, 1
        // Predicated region
        $region73: #{tpu_custom_call.1} parent=71 // pred_check
          %p430 = pneg %p135
        $region74: #{tpu_custom_call.1} parent=71 // pred_check_branch
          %432 = sbr.rel (%p430) target = $region76
        $region75: #{tpu_custom_call.1} parent=71 // pred_region
          %433 = dma.done [#allocation7], 16
        $region76: #{tpu_custom_call.1} parent=71 // pred_fallthru
          _
        // Predicated region
        $region77: #{tpu_custom_call.1} parent=71 // pred_check
          %p434 = pneg %p177
        $region78: #{tpu_custom_call.1} parent=71 // pred_check_branch
          %436 = sbr.rel (%p434) target = $region80
        $region79: #{tpu_custom_call.1} parent=71 // pred_region
          %437 = dma.done [#allocation10], 16
        $region80: #{tpu_custom_call.1} parent=71 // pred_fallthru
          _
        // Predicated region
        $region81: #{tpu_custom_call.1} parent=71 // pred_check
          %p438 = pneg %p198
        $region82: #{tpu_custom_call.1} parent=71 // pred_check_branch
          %440 = sbr.rel (%p438) target = $region84
        $region83: #{tpu_custom_call.1} parent=71 // pred_region
          %441 = dma.done [#allocation10], 16
        $region84: #{tpu_custom_call.1} parent=71 // pred_fallthru
          _
        // Predicated region
        $region85: #{tpu_custom_call.1} parent=71 // pred_check
          %p442 = pneg %p219
        $region86: #{tpu_custom_call.1} parent=71 // pred_check_branch
          %444 = sbr.rel (%p442) target = $region88
        $region87: #{tpu_custom_call.1} parent=71 // pred_region
          %445 = dma.done [#allocation13], 16
        $region88: #{tpu_custom_call.1} parent=71 // pred_fallthru
          _
        %p446 = scmp.lt.s32.totalorder %s30, 1
        %s447 = scalar_select %p446, %s30, 1
        %s448 = smul.addr %s447, 8
        %s449 = scalar_lea.vmem %s0, %s448
        %p450 = pneg %p51
        %p451 = pneg %p48
        %p452 = pneg %p72
        %p453 = pneg %p69
        %p454 = pneg %p93
        %p455 = pneg %p90
        %p456 = pneg %p114
        %p457 = pneg %p111
        %p458 = pneg %p135
        %p459 = pneg %p132
        %p460 = pneg %p156
        %p461 = pneg %p153
        %p462 = pneg %p177
        %p463 = pneg %p174
        %p464 = pneg %p198
        %p465 = pneg %p195
        %p466 = pneg %p219
        %p467 = pneg %p216
        %p468 = pneg %p240
        %p469 = pneg %p237
        %p470 = pneg %p261
        %p471 = pneg %p258
        %p472 = pneg %p282
        %p473 = pneg %p279
        %p474 = pneg %p303
        %p475 = pneg %p300
        %p476 = pneg %p329
        %p477 = pneg %p326
        %s478 = sand.u32 %s316, 1
        %s479 = scalar_lea.sflag [#allocation8], %s478
        %s480 = sand.u32 %s316, 1
        %s481 = smul.addr %s480, 8
        %s482 = scalar_lea.vmem [#allocation14], %s481
        %p483 = scmp.lt.s32.totalorder %s30, 1
        %s484 = scalar_select %p483, %s30, 1
        %s485 = smul.addr %s484, 8
        %s486 = scalar_lea.vmem %s0, %s485
        %v488 = vld [vmem:[%s486] sm:$0xff]
        %v489 = vld [vmem:[%s1] sm:$0x1]
        %v490 = vld [vmem:[%s2] sm:$0x1]
        %vm491 = vcmask 261120
        %v492 = vsel %vm491, %v488, 0.0
        %493 = vadd.xlane.f32.xlu0 %v492
        %v494 = vpop.xlane.xlu0 %493
        %v495 = vrcp.pop 32.0
        %v496 = vmul.f32 %v494, %v495
        %v497 = vsub.f32 %v488, %v496
        %v498 = vmul.f32 %v497, %v497
        %v499 = vsel %vm491, %v498, 0.0
        %500 = vadd.xlane.f32.xlu0 %v499
        %v501 = vpop.xlane.xlu0 %500
        %v502 = vmul.f32 %v501, %v495
        %v503 = vadd.f32 %v502, 1e-05
        %v504 = vrsqrt.pop %v503
        %v505 = vmul.f32 %v497, %v504
        %v507 = vlaneseq
        %v508 = vshrl.u32 %v507, 7
        %v509 = vsub.s32 0, %v508
        %v510 = vrot.slane %v489, %v509
        %v512 = vmul.f32 %v505, %v510
        %v514 = vlaneseq
        %v515 = vshrl.u32 %v514, 7
        %v516 = vsub.s32 0, %v515
        %v517 = vrot.slane %v490, %v516
        %v519 = vadd.f32 %v512, %v517
        %v520 = vpack.c.bf16 %v519, %v519
        %v521 = vld [vmem:[%s3] sm:$0xf]
        %v522 = vld [vmem:[%s3 + $0x4] sm:$0xf]
        %v523 = vld [vmem:[%s3 + $0x8] sm:$0xf]
        %v524 = vld [vmem:[%s3 + $0xc] sm:$0xf]
        %v525 = vld [vmem:[#allocation6] sm:$0x1]
        %v527 = vlaneseq
        %v528 = vshrl.u32 %v527, 7
        %v529 = vsub.s32 0, %v528
        %v530 = vrot.slane %v525, %v529
        %v536 = vunpack.c.l.b16 %v521
        %v537 = vunpack.c.l.b16 %v522
        %v538 = vunpack.c.l.b16 %v523
        %v539 = vunpack.c.l.b16 %v524
        %v540 = vpack.c.b16 %v537, %v536
        %v541 = vpack.c.b16 %v539, %v538
        %v545 = vsel %vm491, %v520, 0
        %547 = vmatprep.subr.bf16.mxu0 0
        %548 = vmatpush1.bf16.msra.mxu0 %v540
        %549 = vmatprep.subr.bf16.mxu0 0
        %550 = vmatpush1.bf16.msra.mxu0 %v541
        %551 = vmatprep.subr.bf16.mxu0 0
        %552 = vmatpush1.bf16.msra.mxu0 0
        %553 = vmatprep.subr.bf16.mxu0 0
        %554 = vmatpush1.bf16.msra.mxu0 0
        %555 = vmatprep.subr.bf16.mxu0 0
        %556 = vmatpush1.bf16.msra.mxu0 0
        %557 = vmatprep.subr.bf16.mxu0 0
        %558 = vmatpush1.bf16.msra.mxu0 0
        %559 = vmatprep.subr.bf16.mxu0 0
        %560 = vmatpush1.bf16.msra.mxu0 0
        %561 = vmatprep.subr.bf16.mxu0 0
        %562 = vmatpush1.bf16.msra.mxu0 0
        %563 = vmatprep.subr.bf16.mxu0 0
        %564 = vmatpush1.bf16.msra.mxu0 0
        %565 = vmatprep.subr.bf16.mxu0 0
        %566 = vmatpush1.bf16.msra.mxu0 0
        %567 = vmatprep.subr.bf16.mxu0 0
        %568 = vmatpush1.bf16.msra.mxu0 0
        %569 = vmatprep.subr.bf16.mxu0 0
        %570 = vmatpush1.bf16.msra.mxu0 0
        %571 = vmatprep.subr.bf16.mxu0 0
        %572 = vmatpush1.bf16.msra.mxu0 0
        %573 = vmatprep.subr.bf16.mxu0 0
        %574 = vmatpush1.bf16.msra.mxu0 0
        %575 = vmatprep.subr.bf16.mxu0 0
        %576 = vmatpush1.bf16.msra.mxu0 0
        %577 = vmatprep.subr.bf16.mxu0 0
        %578 = vmatpush1.bf16.msra.mxu0 0
        %579 = vmatprep.mubr.bf16.mxu0 0
        %580 = vmatmul.mubr.bf16.gmra.mrb[0].mxu0 %v545
        %v581 = vpop.f32.mrb[0].mxu0
        %v582 = vadd.f32 %v530, %v581
        %v583 = vpop.f32.mrb[0].mxu0
        %v584 = vpop.f32.mrb[0].mxu0
        %v585 = vpop.f32.mrb[0].mxu0
        %586 = vdwg.mxu0
        %v587 = vmul.f32 %v582, 0.35355338
        %v588 = vpack.c.bf16 %v587, %v587
        %vm589 = vcmask 60416
        %590 = vst.msk [vmem:[#allocation2] sm:$0xf] %vm589, %v588
        %v591 = vpack.c.bf16 %v582, %v582
        %v593 = vunpack.c.l.b16 %v591
        %v594 = vpack.c.b16 %v593, %v593
        %595 = vrot.lane.b32.xlu0 %v594, 96
        %v596 = vpop.permute.xlu0 %595
        %598 = vst.msk [vmem:[#allocation3] sm:$0xf] %vm589, %v596
        %599 = vrot.lane.b32.xlu0 %v594, 64
        %v600 = vpop.permute.xlu0 %599
        %602 = vst.msk [vmem:[#allocation4] sm:$0xf] %vm589, %v600
        %v604 = vunpack.c.l.b16 %v588
        %v605 = vpack.c.b16 %v604, %v604
        %606 = vrot.lane.b32.xlu0 %v605, 120
        %v607 = vpop.permute.xlu0 %606
        %s609 = scalar_lea.vmem [#allocation2], 4
        %610 = vst.msk [vmem:[%s609] sm:$0xf] %vm589, %v607
        %611 = vrot.lane.b32.xlu0 %v594, 88
        %v612 = vpop.permute.xlu0 %611
        %s614 = scalar_lea.vmem [#allocation3], 4
        %615 = vst.msk [vmem:[%s614] sm:$0xf] %vm589, %v612
        %616 = vrot.lane.b32.xlu0 %v594, 56
        %v617 = vpop.permute.xlu0 %616
        %s619 = scalar_lea.vmem [#allocation4], 4
        %620 = vst.msk [vmem:[%s619] sm:$0xf] %vm589, %v617
        %621 = vrot.lane.b32.xlu0 %v605, 112
        %v622 = vpop.permute.xlu0 %621
        %s624 = scalar_lea.vmem [#allocation2], 8
        %625 = vst.msk [vmem:[%s624] sm:$0xf] %vm589, %v622
        %626 = vrot.lane.b32.xlu0 %v594, 80
        %v627 = vpop.permute.xlu0 %626
        %s629 = scalar_lea.vmem [#allocation3], 8
        %630 = vst.msk [vmem:[%s629] sm:$0xf] %vm589, %v627
        %631 = vrot.lane.b32.xlu0 %v594, 48
        %v632 = vpop.permute.xlu0 %631
        %s634 = scalar_lea.vmem [#allocation4], 8
        %635 = vst.msk [vmem:[%s634] sm:$0xf] %vm589, %v632
        %636 = vrot.lane.b32.xlu0 %v605, 104
        %v637 = vpop.permute.xlu0 %636
        %s639 = scalar_lea.vmem [#allocation2], 12
        %640 = vst.msk [vmem:[%s639] sm:$0xf] %vm589, %v637
        %641 = vrot.lane.b32.xlu0 %v594, 72
        %v642 = vpop.permute.xlu0 %641
        %s644 = scalar_lea.vmem [#allocation3], 12
        %645 = vst.msk [vmem:[%s644] sm:$0xf] %vm589, %v642
        %646 = vrot.lane.b32.xlu0 %v594, 40
        %v647 = vpop.permute.xlu0 %646
        %s649 = scalar_lea.vmem [#allocation4], 12
        %650 = vst.msk [vmem:[%s649] sm:$0xf] %vm589, %v647
        %v651 = vld [vmem:[#allocation3] sm:$0xf]
        %v652 = vld [vmem:[#allocation3 + $0x4] sm:$0xf]
        %v653 = vld [vmem:[#allocation3 + $0x8] sm:$0xf]
        %v654 = vld [vmem:[#allocation3 + $0xc] sm:$0xf]
        %v655 = vld [vmem:[#allocation4] sm:$0xf]
        %v656 = vld [vmem:[#allocation4 + $0x4] sm:$0xf]
        %v657 = vld [vmem:[#allocation4 + $0x8] sm:$0xf]
        %v658 = vld [vmem:[#allocation4 + $0xc] sm:$0xf]
        %v659 = vld [vmem:[#allocation2] sm:$0xf]
        %v660 = vld [vmem:[#allocation2 + $0x4] sm:$0xf]
        %v661 = vld [vmem:[#allocation2 + $0x8] sm:$0xf]
        %v662 = vld [vmem:[#allocation2 + $0xc] sm:$0xf]
        %vm663 = vcmask 64512
        %v665 = vsel %vm663, %v659, 0
        %v668 = vsel %vm663, %v651, 0
        %670 = vmatprep.subr.bf16.mxu0 0
        %671 = vmatpush1.bf16.xpose.msra.mxu0 %v668
        %672 = vmatprep.subr.bf16.mxu0 0
        %673 = vmatpush1.bf16.xpose.msra.mxu0 0
        %674 = vmatprep.subr.bf16.mxu0 0
        %675 = vmatpush1.bf16.xpose.msra.mxu0 0
        %676 = vmatprep.subr.bf16.mxu0 0
        %677 = vmatpush1.bf16.xpose.msra.mxu0 0
        %678 = vmatprep.subr.bf16.mxu0 0
        %679 = vmatpush1.bf16.xpose.msra.mxu0 0
        %680 = vmatprep.subr.bf16.mxu0 0
        %681 = vmatpush1.bf16.xpose.msra.mxu0 0
        %682 = vmatprep.subr.bf16.mxu0 0
        %683 = vmatpush1.bf16.xpose.msra.mxu0 0
        %684 = vmatprep.subr.bf16.mxu0 0
        %685 = vmatpush1.bf16.xpose.msra.mxu0 0
        %686 = vmatprep.subr.bf16.mxu0 0
        %687 = vmatpush1.bf16.xpose.msra.mxu0 0
        %688 = vmatprep.subr.bf16.mxu0 0
        %689 = vmatpush1.bf16.xpose.msra.mxu0 0
        %690 = vmatprep.subr.bf16.mxu0 0
        %691 = vmatpush1.bf16.xpose.msra.mxu0 0
        %692 = vmatprep.subr.bf16.mxu0 0
        %693 = vmatpush1.bf16.xpose.msra.mxu0 0
        %694 = vmatprep.subr.bf16.mxu0 0
        %695 = vmatpush1.bf16.xpose.msra.mxu0 0
        %696 = vmatprep.subr.bf16.mxu0 0
        %697 = vmatpush1.bf16.xpose.msra.mxu0 0
        %698 = vmatprep.subr.bf16.mxu0 0
        %699 = vmatpush1.bf16.xpose.msra.mxu0 0
        %700 = vmatprep.subr.bf16.mxu0 0
        %701 = vmatpush1.bf16.xpose.msra.mxu0 0
        %702 = vmatprep.mubr.bf16.mxu0 0
        %703 = vmatmul.mubr.bf16.gmra.mrb[0].mxu0 %v665
        %v704 = vpop.f32.mrb[0].mxu0
        %v705 = vadd.f32 0.0, %v704
        %v706 = vpop.f32.mrb[0].mxu0
        %v707 = vpop.f32.mrb[0].mxu0
        %v708 = vpop.f32.mrb[0].mxu0
        %709 = vdwg.mxu0
        %v711 = vsel %vm663, %v660, 0
        %v714 = vsel %vm663, %v652, 0
        %716 = vmatprep.subr.bf16.mxu0 0
        %717 = vmatpush1.bf16.xpose.msra.mxu0 %v714
        %718 = vmatprep.subr.bf16.mxu0 0
        %719 = vmatpush1.bf16.xpose.msra.mxu0 0
        %720 = vmatprep.subr.bf16.mxu0 0
        %721 = vmatpush1.bf16.xpose.msra.mxu0 0
        %722 = vmatprep.subr.bf16.mxu0 0
        %723 = vmatpush1.bf16.xpose.msra.mxu0 0
        %724 = vmatprep.subr.bf16.mxu0 0
        %725 = vmatpush1.bf16.xpose.msra.mxu0 0
        %726 = vmatprep.subr.bf16.mxu0 0
        %727 = vmatpush1.bf16.xpose.msra.mxu0 0
        %728 = vmatprep.subr.bf16.mxu0 0
        %729 = vmatpush1.bf16.xpose.msra.mxu0 0
        %730 = vmatprep.subr.bf16.mxu0 0
        %731 = vmatpush1.bf16.xpose.msra.mxu0 0
        %732 = vmatprep.subr.bf16.mxu0 0
        %733 = vmatpush1.bf16.xpose.msra.mxu0 0
        %734 = vmatprep.subr.bf16.mxu0 0
        %735 = vmatpush1.bf16.xpose.msra.mxu0 0
        %736 = vmatprep.subr.bf16.mxu0 0
        %737 = vmatpush1.bf16.xpose.msra.mxu0 0
        %738 = vmatprep.subr.bf16.mxu0 0
        %739 = vmatpush1.bf16.xpose.msra.mxu0 0
        %740 = vmatprep.subr.bf16.mxu0 0
        %741 = vmatpush1.bf16.xpose.msra.mxu0 0
        %742 = vmatprep.subr.bf16.mxu0 0
        %743 = vmatpush1.bf16.xpose.msra.mxu0 0
        %744 = vmatprep.subr.bf16.mxu0 0
        %745 = vmatpush1.bf16.xpose.msra.mxu0 0
        %746 = vmatprep.subr.bf16.mxu0 0
        %747 = vmatpush1.bf16.xpose.msra.mxu0 0
        %748 = vmatprep.mubr.bf16.mxu0 0
        %749 = vmatmul.mubr.bf16.gmra.mrb[0].mxu0 %v711
        %v750 = vpop.f32.mrb[0].mxu0
        %v751 = vadd.f32 0.0, %v750
        %v752 = vpop.f32.mrb[0].mxu0
        %v753 = vpop.f32.mrb[0].mxu0
        %v754 = vpop.f32.mrb[0].mxu0
        %755 = vdwg.mxu0
        %v757 = vsel %vm663, %v661, 0
        %v760 = vsel %vm663, %v653, 0
        %762 = vmatprep.subr.bf16.mxu0 0
        %763 = vmatpush1.bf16.xpose.msra.mxu0 %v760
        %764 = vmatprep.subr.bf16.mxu0 0
        %765 = vmatpush1.bf16.xpose.msra.mxu0 0
        %766 = vmatprep.subr.bf16.mxu0 0
        %767 = vmatpush1.bf16.xpose.msra.mxu0 0
        %768 = vmatprep.subr.bf16.mxu0 0
        %769 = vmatpush1.bf16.xpose.msra.mxu0 0
        %770 = vmatprep.subr.bf16.mxu0 0
        %771 = vmatpush1.bf16.xpose.msra.mxu0 0
        %772 = vmatprep.subr.bf16.mxu0 0
        %773 = vmatpush1.bf16.xpose.msra.mxu0 0
        %774 = vmatprep.subr.bf16.mxu0 0
        %775 = vmatpush1.bf16.xpose.msra.mxu0 0
        %776 = vmatprep.subr.bf16.mxu0 0
        %777 = vmatpush1.bf16.xpose.msra.mxu0 0
        %778 = vmatprep.subr.bf16.mxu0 0
        %779 = vmatpush1.bf16.xpose.msra.mxu0 0
        %780 = vmatprep.subr.bf16.mxu0 0
        %781 = vmatpush1.bf16.xpose.msra.mxu0 0
        %782 = vmatprep.subr.bf16.mxu0 0
        %783 = vmatpush1.bf16.xpose.msra.mxu0 0
        %784 = vmatprep.subr.bf16.mxu0 0
        %785 = vmatpush1.bf16.xpose.msra.mxu0 0
        %786 = vmatprep.subr.bf16.mxu0 0
        %787 = vmatpush1.bf16.xpose.msra.mxu0 0
        %788 = vmatprep.subr.bf16.mxu0 0
        %789 = vmatpush1.bf16.xpose.msra.mxu0 0
        %790 = vmatprep.subr.bf16.mxu0 0
        %791 = vmatpush1.bf16.xpose.msra.mxu0 0
        %792 = vmatprep.subr.bf16.mxu0 0
        %793 = vmatpush1.bf16.xpose.msra.mxu0 0
        %794 = vmatprep.mubr.bf16.mxu0 0
        %795 = vmatmul.mubr.bf16.gmra.mrb[0].mxu0 %v757
        %v796 = vpop.f32.mrb[0].mxu0
        %v797 = vadd.f32 0.0, %v796
        %v798 = vpop.f32.mrb[0].mxu0
        %v799 = vpop.f32.mrb[0].mxu0
        %v800 = vpop.f32.mrb[0].mxu0
        %801 = vdwg.mxu0
        %v803 = vsel %vm663, %v662, 0
        %v806 = vsel %vm663, %v654, 0
        %808 = vmatprep.subr.bf16.mxu0 0
        %809 = vmatpush1.bf16.xpose.msra.mxu0 %v806
        %810 = vmatprep.subr.bf16.mxu0 0
        %811 = vmatpush1.bf16.xpose.msra.mxu0 0
        %812 = vmatprep.subr.bf16.mxu0 0
        %813 = vmatpush1.bf16.xpose.msra.mxu0 0
        %814 = vmatprep.subr.bf16.mxu0 0
        %815 = vmatpush1.bf16.xpose.msra.mxu0 0
        %816 = vmatprep.subr.bf16.mxu0 0
        %817 = vmatpush1.bf16.xpose.msra.mxu0 0
        %818 = vmatprep.subr.bf16.mxu0 0
        %819 = vmatpush1.bf16.xpose.msra.mxu0 0
        %820 = vmatprep.subr.bf16.mxu0 0
        %821 = vmatpush1.bf16.xpose.msra.mxu0 0
        %822 = vmatprep.subr.bf16.mxu0 0
        %823 = vmatpush1.bf16.xpose.msra.mxu0 0
        %824 = vmatprep.subr.bf16.mxu0 0
        %825 = vmatpush1.bf16.xpose.msra.mxu0 0
        %826 = vmatprep.subr.bf16.mxu0 0
        %827 = vmatpush1.bf16.xpose.msra.mxu0 0
        %828 = vmatprep.subr.bf16.mxu0 0
        %829 = vmatpush1.bf16.xpose.msra.mxu0 0
        %830 = vmatprep.subr.bf16.mxu0 0
        %831 = vmatpush1.bf16.xpose.msra.mxu0 0
        %832 = vmatprep.subr.bf16.mxu0 0
        %833 = vmatpush1.bf16.xpose.msra.mxu0 0
        %834 = vmatprep.subr.bf16.mxu0 0
        %835 = vmatpush1.bf16.xpose.msra.mxu0 0
        %836 = vmatprep.subr.bf16.mxu0 0
        %837 = vmatpush1.bf16.xpose.msra.mxu0 0
        %838 = vmatprep.subr.bf16.mxu0 0
        %839 = vmatpush1.bf16.xpose.msra.mxu0 0
        %840 = vmatprep.mubr.bf16.mxu0 0
        %841 = vmatmul.mubr.bf16.gmra.mrb[0].mxu0 %v803
        %v842 = vpop.f32.mrb[0].mxu0
        %v843 = vadd.f32 0.0, %v842
        %v844 = vpop.f32.mrb[0].mxu0
        %v845 = vpop.f32.mrb[0].mxu0
        %v846 = vpop.f32.mrb[0].mxu0
        %847 = vdwg.mxu0
        %v848 = vlaneseq
        %v849 = vshrl.u32 %v848, 7
        %v850 = vlaneseq
        %v851 = vand.u32 %v850, 127
        %vm852 = vcmp.le.s32.totalorder %v851, %v849
        %v853 = vsel %vm852, 1, 0
        %vm854 = vcmp.eq.s32.totalorder %v853, 1
        %v855 = vsel %vm854, %v705, -1e+30
        %v856 = vsel %vm854, %v751, -1e+30
        %v857 = vsel %vm854, %v797, -1e+30
        %v858 = vsel %vm854, %v843, -1e+30
        %v859 = vsel %vm663, %v855, -inf
        %860 = vmax.xlane.f32.xlu0 %v859
        %v861 = vpop.xlane.xlu0 %860
        %v862 = vsel %vm663, %v856, -inf
        %863 = vmax.xlane.f32.xlu0 %v862
        %v864 = vpop.xlane.xlu0 %863
        %v865 = vsel %vm663, %v857, -inf
        %866 = vmax.xlane.f32.xlu0 %v865
        %v867 = vpop.xlane.xlu0 %866
        %v868 = vsel %vm663, %v858, -inf
        %869 = vmax.xlane.f32.xlu0 %v868
        %v870 = vpop.xlane.xlu0 %869
        %v871 = vsub.f32 %v855, %v861
        %v872 = vsub.f32 %v856, %v864
        %v873 = vsub.f32 %v857, %v867
        %v874 = vsub.f32 %v858, %v870
        %v875 = vmul.f32 %v871, 1.442695
        %v876 = vpow.pop %v875
        %v877 = vmul.f32 %v872, 1.442695
        %v878 = vpow.pop %v877
        %v879 = vmul.f32 %v873, 1.442695
        %v880 = vpow.pop %v879
        %v881 = vmul.f32 %v874, 1.442695
        %v882 = vpow.pop %v881
        %v883 = vsel %vm663, %v876, 0.0
        %884 = vadd.xlane.f32.xlu0 %v883
        %v885 = vpop.xlane.xlu0 %884
        %v886 = vsel %vm663, %v878, 0.0
        %887 = vadd.xlane.f32.xlu0 %v886
        %v888 = vpop.xlane.xlu0 %887
        %v889 = vsel %vm663, %v880, 0.0
        %890 = vadd.xlane.f32.xlu0 %v889
        %v891 = vpop.xlane.xlu0 %890
        %v892 = vsel %vm663, %v882, 0.0
        %893 = vadd.xlane.f32.xlu0 %v892
        %v894 = vpop.xlane.xlu0 %893
        %v895 = vrcp.pop %v885
        %v896 = vmul.f32 %v876, %v895
        %v897 = vrcp.pop %v888
        %v898 = vmul.f32 %v878, %v897
        %v899 = vrcp.pop %v891
        %v900 = vmul.f32 %v880, %v899
        %v901 = vrcp.pop %v894
        %v902 = vmul.f32 %v882, %v901
        %v903 = vpack.c.bf16 %v896, %v896
        %v904 = vpack.c.bf16 %v898, %v898
        %v905 = vpack.c.bf16 %v900, %v900
        %v906 = vpack.c.bf16 %v902, %v902
        %v908 = vsel %vm663, %v903, 0
        %vm910 = vcmask 1043456
        %v912 = vsel %vm910, %v655, 0
        %914 = vmatprep.subr.bf16.mxu0 0
        %915 = vmatpush1.bf16.msra.mxu0 %v912
        %916 = vmatprep.subr.bf16.mxu0 0
        %917 = vmatpush1.bf16.msra.mxu0 0
        %918 = vmatprep.subr.bf16.mxu0 0
        %919 = vmatpush1.bf16.msra.mxu0 0
        %920 = vmatprep.subr.bf16.mxu0 0
        %921 = vmatpush1.bf16.msra.mxu0 0
        %922 = vmatprep.subr.bf16.mxu0 0
        %923 = vmatpush1.bf16.msra.mxu0 0
        %924 = vmatprep.subr.bf16.mxu0 0
        %925 = vmatpush1.bf16.msra.mxu0 0
        %926 = vmatprep.subr.bf16.mxu0 0
        %927 = vmatpush1.bf16.msra.mxu0 0
        %928 = vmatprep.subr.bf16.mxu0 0
        %929 = vmatpush1.bf16.msra.mxu0 0
        %930 = vmatprep.subr.bf16.mxu0 0
        %931 = vmatpush1.bf16.msra.mxu0 0
        %932 = vmatprep.subr.bf16.mxu0 0
        %933 = vmatpush1.bf16.msra.mxu0 0
        %934 = vmatprep.subr.bf16.mxu0 0
        %935 = vmatpush1.bf16.msra.mxu0 0
        %936 = vmatprep.subr.bf16.mxu0 0
        %937 = vmatpush1.bf16.msra.mxu0 0
        %938 = vmatprep.subr.bf16.mxu0 0
        %939 = vmatpush1.bf16.msra.mxu0 0
        %940 = vmatprep.subr.bf16.mxu0 0
        %941 = vmatpush1.bf16.msra.mxu0 0
        %942 = vmatprep.subr.bf16.mxu0 0
        %943 = vmatpush1.bf16.msra.mxu0 0
        %944 = vmatprep.subr.bf16.mxu0 0
        %945 = vmatpush1.bf16.msra.mxu0 0
        %946 = vmatprep.mubr.bf16.mxu0 0
        %947 = vmatmul.mubr.bf16.gmra.mrb[0].mxu0 %v908
        %v948 = vpop.f32.mrb[0].mxu0
        %v949 = vadd.f32 0.0, %v948
        %v950 = vpop.f32.mrb[0].mxu0
        %v951 = vpop.f32.mrb[0].mxu0
        %v952 = vpop.f32.mrb[0].mxu0
        %953 = vdwg.mxu0
        %v955 = vsel %vm663, %v904, 0
        %v958 = vsel %vm910, %v656, 0
        %960 = vmatprep.subr.bf16.mxu0 0
        %961 = vmatpush1.bf16.msra.mxu0 %v958
        %962 = vmatprep.subr.bf16.mxu0 0
        %963 = vmatpush1.bf16.msra.mxu0 0
        %964 = vmatprep.subr.bf16.mxu0 0
        %965 = vmatpush1.bf16.msra.mxu0 0
        %966 = vmatprep.subr.bf16.mxu0 0
        %967 = vmatpush1.bf16.msra.mxu0 0
        %968 = vmatprep.subr.bf16.mxu0 0
        %969 = vmatpush1.bf16.msra.mxu0 0
        %970 = vmatprep.subr.bf16.mxu0 0
        %971 = vmatpush1.bf16.msra.mxu0 0
        %972 = vmatprep.subr.bf16.mxu0 0
        %973 = vmatpush1.bf16.msra.mxu0 0
        %974 = vmatprep.subr.bf16.mxu0 0
        %975 = vmatpush1.bf16.msra.mxu0 0
        %976 = vmatprep.subr.bf16.mxu0 0
        %977 = vmatpush1.bf16.msra.mxu0 0
        %978 = vmatprep.subr.bf16.mxu0 0
        %979 = vmatpush1.bf16.msra.mxu0 0
        %980 = vmatprep.subr.bf16.mxu0 0
        %981 = vmatpush1.bf16.msra.mxu0 0
        %982 = vmatprep.subr.bf16.mxu0 0
        %983 = vmatpush1.bf16.msra.mxu0 0
        %984 = vmatprep.subr.bf16.mxu0 0
        %985 = vmatpush1.bf16.msra.mxu0 0
        %986 = vmatprep.subr.bf16.mxu0 0
        %987 = vmatpush1.bf16.msra.mxu0 0
        %988 = vmatprep.subr.bf16.mxu0 0
        %989 = vmatpush1.bf16.msra.mxu0 0
        %990 = vmatprep.subr.bf16.mxu0 0
        %991 = vmatpush1.bf16.msra.mxu0 0
        %992 = vmatprep.mubr.bf16.mxu0 0
        %993 = vmatmul.mubr.bf16.gmra.mrb[0].mxu0 %v955
        %v994 = vpop.f32.mrb[0].mxu0
        %v995 = vadd.f32 0.0, %v994
        %v996 = vpop.f32.mrb[0].mxu0
        %v997 = vpop.f32.mrb[0].mxu0
        %v998 = vpop.f32.mrb[0].mxu0
        %999 = vdwg.mxu0
        %v1001 = vsel %vm663, %v905, 0
        %v1004 = vsel %vm910, %v657, 0
        %1006 = vmatprep.subr.bf16.mxu0 0
        %1007 = vmatpush1.bf16.msra.mxu0 %v1004
        %1008 = vmatprep.subr.bf16.mxu0 0
        %1009 = vmatpush1.bf16.msra.mxu0 0
        %1010 = vmatprep.subr.bf16.mxu0 0
        %1011 = vmatpush1.bf16.msra.mxu0 0
        %1012 = vmatprep.subr.bf16.mxu0 0
        %1013 = vmatpush1.bf16.msra.mxu0 0
        %1014 = vmatprep.subr.bf16.mxu0 0
        %1015 = vmatpush1.bf16.msra.mxu0 0
        %1016 = vmatprep.subr.bf16.mxu0 0
        %1017 = vmatpush1.bf16.msra.mxu0 0
        %1018 = vmatprep.subr.bf16.mxu0 0
        %1019 = vmatpush1.bf16.msra.mxu0 0
        %1020 = vmatprep.subr.bf16.mxu0 0
        %1021 = vmatpush1.bf16.msra.mxu0 0
        %1022 = vmatprep.subr.bf16.mxu0 0
        %1023 = vmatpush1.bf16.msra.mxu0 0
        %1024 = vmatprep.subr.bf16.mxu0 0
        %1025 = vmatpush1.bf16.msra.mxu0 0
        %1026 = vmatprep.subr.bf16.mxu0 0
        %1027 = vmatpush1.bf16.msra.mxu0 0
        %1028 = vmatprep.subr.bf16.mxu0 0
        %1029 = vmatpush1.bf16.msra.mxu0 0
        %1030 = vmatprep.subr.bf16.mxu0 0
        %1031 = vmatpush1.bf16.msra.mxu0 0
        %1032 = vmatprep.subr.bf16.mxu0 0
        %1033 = vmatpush1.bf16.msra.mxu0 0
        %1034 = vmatprep.subr.bf16.mxu0 0
        %1035 = vmatpush1.bf16.msra.mxu0 0
        %1036 = vmatprep.subr.bf16.mxu0 0
        %1037 = vmatpush1.bf16.msra.mxu0 0
        %1038 = vmatprep.mubr.bf16.mxu0 0
        %1039 = vmatmul.mubr.bf16.gmra.mrb[0].mxu0 %v1001
        %v1040 = vpop.f32.mrb[0].mxu0
        %v1041 = vadd.f32 0.0, %v1040
        %v1042 = vpop.f32.mrb[0].mxu0
        %v1043 = vpop.f32.mrb[0].mxu0
        %v1044 = vpop.f32.mrb[0].mxu0
        %1045 = vdwg.mxu0
        %v1047 = vsel %vm663, %v906, 0
        %v1050 = vsel %vm910, %v658, 0
        %1052 = vmatprep.subr.bf16.mxu0 0
        %1053 = vmatpush1.bf16.msra.mxu0 %v1050
        %1054 = vmatprep.subr.bf16.mxu0 0
        %1055 = vmatpush1.bf16.msra.mxu0 0
        %1056 = vmatprep.subr.bf16.mxu0 0
        %1057 = vmatpush1.bf16.msra.mxu0 0
        %1058 = vmatprep.subr.bf16.mxu0 0
        %1059 = vmatpush1.bf16.msra.mxu0 0
        %1060 = vmatprep.subr.bf16.mxu0 0
        %1061 = vmatpush1.bf16.msra.mxu0 0
        %1062 = vmatprep.subr.bf16.mxu0 0
        %1063 = vmatpush1.bf16.msra.mxu0 0
        %1064 = vmatprep.subr.bf16.mxu0 0
        %1065 = vmatpush1.bf16.msra.mxu0 0
        %1066 = vmatprep.subr.bf16.mxu0 0
        %1067 = vmatpush1.bf16.msra.mxu0 0
        %1068 = vmatprep.subr.bf16.mxu0 0
        %1069 = vmatpush1.bf16.msra.mxu0 0
        %1070 = vmatprep.subr.bf16.mxu0 0
        %1071 = vmatpush1.bf16.msra.mxu0 0
        %1072 = vmatprep.subr.bf16.mxu0 0
        %1073 = vmatpush1.bf16.msra.mxu0 0
        %1074 = vmatprep.subr.bf16.mxu0 0
        %1075 = vmatpush1.bf16.msra.mxu0 0
        %1076 = vmatprep.subr.bf16.mxu0 0
        %1077 = vmatpush1.bf16.msra.mxu0 0
        %1078 = vmatprep.subr.bf16.mxu0 0
        %1079 = vmatpush1.bf16.msra.mxu0 0
        %1080 = vmatprep.subr.bf16.mxu0 0
        %1081 = vmatpush1.bf16.msra.mxu0 0
        %1082 = vmatprep.subr.bf16.mxu0 0
        %1083 = vmatpush1.bf16.msra.mxu0 0
        %1084 = vmatprep.mubr.bf16.mxu0 0
        %1085 = vmatmul.mubr.bf16.gmra.mrb[0].mxu0 %v1047
        %v1086 = vpop.f32.mrb[0].mxu0
        %v1087 = vadd.f32 0.0, %v1086
        %v1088 = vpop.f32.mrb[0].mxu0
        %v1089 = vpop.f32.mrb[0].mxu0
        %v1090 = vpop.f32.mrb[0].mxu0
        %1091 = vdwg.mxu0
        %1092 = vst.msk [vmem:[#allocation5] sm:$0xff] %vm663, %v949
        %1094 = vrot.lane.b32.xlu0 %v995, 8
        %v1095 = vpop.permute.xlu0 %1094
        %vm1097 = vcmask 130112
        %1098 = vst.msk [vmem:[#allocation5] sm:$0xff] %vm1097, %v1095
        %1100 = vrot.lane.b32.xlu0 %v1041, 16
        %v1101 = vpop.permute.xlu0 %1100
        %vm1103 = vcmask 195712
        %1104 = vst.msk [vmem:[#allocation5] sm:$0xff] %vm1103, %v1101
        %1106 = vrot.lane.b32.xlu0 %v1087, 24
        %v1107 = vpop.permute.xlu0 %1106
        %vm1109 = vcmask 261312
        %1110 = vst.msk [vmem:[#allocation5] sm:$0xff] %vm1109, %v1107
        %v1111 = vld [vmem:[#allocation5] sm:$0xff]
        %v1112 = vpack.c.bf16 %v1111, %v1111
        %v1113 = vld [vmem:[%s5] sm:$0xf]
        %v1114 = vld [vmem:[%s5 + $0x4] sm:$0xf]
        %v1115 = vld [vmem:[%s5 + $0x8] sm:$0xf]
        %v1116 = vld [vmem:[%s5 + $0xc] sm:$0xf]
        %v1117 = vld [vmem:[#allocation9] sm:$0x1]
        %v1119 = vlaneseq
        %v1120 = vshrl.u32 %v1119, 7
        %v1121 = vsub.s32 0, %v1120
        %v1122 = vrot.slane %v1117, %v1121
        %v1128 = vunpack.c.l.b16 %v1113
        %v1129 = vunpack.c.l.b16 %v1114
        %v1130 = vunpack.c.l.b16 %v1115
        %v1131 = vunpack.c.l.b16 %v1116
        %v1132 = vpack.c.b16 %v1129, %v1128
        %v1133 = vpack.c.b16 %v1131, %v1130
        %v1137 = vsel %vm491, %v1112, 0
        %1139 = vmatprep.subr.bf16.mxu0 0
        %1140 = vmatpush1.bf16.msra.mxu0 %v1132
        %1141 = vmatprep.subr.bf16.mxu0 0
        %1142 = vmatpush1.bf16.msra.mxu0 %v1133
        %1143 = vmatprep.subr.bf16.mxu0 0
        %1144 = vmatpush1.bf16.msra.mxu0 0
        %1145 = vmatprep.subr.bf16.mxu0 0
        %1146 = vmatpush1.bf16.msra.mxu0 0
        %1147 = vmatprep.subr.bf16.mxu0 0
        %1148 = vmatpush1.bf16.msra.mxu0 0
        %1149 = vmatprep.subr.bf16.mxu0 0
        %1150 = vmatpush1.bf16.msra.mxu0 0
        %1151 = vmatprep.subr.bf16.mxu0 0
        %1152 = vmatpush1.bf16.msra.mxu0 0
        %1153 = vmatprep.subr.bf16.mxu0 0
        %1154 = vmatpush1.bf16.msra.mxu0 0
        %1155 = vmatprep.subr.bf16.mxu0 0
        %1156 = vmatpush1.bf16.msra.mxu0 0
        %1157 = vmatprep.subr.bf16.mxu0 0
        %1158 = vmatpush1.bf16.msra.mxu0 0
        %1159 = vmatprep.subr.bf16.mxu0 0
        %1160 = vmatpush1.bf16.msra.mxu0 0
        %1161 = vmatprep.subr.bf16.mxu0 0
        %1162 = vmatpush1.bf16.msra.mxu0 0
        %1163 = vmatprep.subr.bf16.mxu0 0
        %1164 = vmatpush1.bf16.msra.mxu0 0
        %1165 = vmatprep.subr.bf16.mxu0 0
        %1166 = vmatpush1.bf16.msra.mxu0 0
        %1167 = vmatprep.subr.bf16.mxu0 0
        %1168 = vmatpush1.bf16.msra.mxu0 0
        %1169 = vmatprep.subr.bf16.mxu0 0
        %1170 = vmatpush1.bf16.msra.mxu0 0
        %1171 = vmatprep.mubr.bf16.mxu0 0
        %1172 = vmatmul.mubr.bf16.gmra.mrb[0].mxu0 %v1137
        %v1173 = vpop.f32.mrb[0].mxu0
        %v1174 = vadd.f32 %v1122, %v1173
        %v1175 = vpop.f32.mrb[0].mxu0
        %v1176 = vpop.f32.mrb[0].mxu0
        %v1177 = vpop.f32.mrb[0].mxu0
        %1178 = vdwg.mxu0
        %v1179 = vadd.f32 %v488, %v1174
        %v1180 = vld [vmem:[#allocation11] sm:$0x1]
        %v1181 = vld [vmem:[#allocation12] sm:$0x1]
        %v1182 = vsel %vm491, %v1179, 0.0
        %1183 = vadd.xlane.f32.xlu0 %v1182
        %v1184 = vpop.xlane.xlu0 %1183
        %v1185 = vmul.f32 %v1184, %v495
        %v1186 = vsub.f32 %v1179, %v1185
        %v1187 = vmul.f32 %v1186, %v1186
        %v1188 = vsel %vm491, %v1187, 0.0
        %1189 = vadd.xlane.f32.xlu0 %v1188
        %v1190 = vpop.xlane.xlu0 %1189
        %v1191 = vmul.f32 %v1190, %v495
        %v1192 = vadd.f32 %v1191, 1e-05
        %v1193 = vrsqrt.pop %v1192
        %v1194 = vmul.f32 %v1186, %v1193
        %v1196 = vlaneseq
        %v1197 = vshrl.u32 %v1196, 7
        %v1198 = vsub.s32 0, %v1197
        %v1199 = vrot.slane %v1180, %v1198
        %v1201 = vmul.f32 %v1194, %v1199
        %v1203 = vlaneseq
        %v1204 = vshrl.u32 %v1203, 7
        %v1205 = vsub.s32 0, %v1204
        %v1206 = vrot.slane %v1181, %v1205
        %v1208 = vadd.f32 %v1201, %v1206
        %v1209 = vpack.c.bf16 %v1208, %v1208
        %v1210 = vld [vmem:[%s9] sm:$0xf]
        %v1211 = vld [vmem:[%s9 + $0x4] sm:$0xf]
        %v1212 = vld [vmem:[%s9 + $0x8] sm:$0xf]
        %v1213 = vld [vmem:[%s9 + $0xc] sm:$0xf]
        %v1214 = vld [vmem:[%s10] sm:$0x1]
        %v1216 = vlaneseq
        %v1217 = vshrl.u32 %v1216, 7
        %v1218 = vsub.s32 0, %v1217
        %v1219 = vrot.slane %v1214, %v1218
        %v1225 = vunpack.c.l.b16 %v1210
        %v1226 = vunpack.c.l.b16 %v1211
        %v1227 = vunpack.c.l.b16 %v1212
        %v1228 = vunpack.c.l.b16 %v1213
        %v1229 = vpack.c.b16 %v1226, %v1225
        %v1230 = vpack.c.b16 %v1228, %v1227
        %v1234 = vsel %vm491, %v1209, 0
        %1236 = vmatprep.subr.bf16.mxu0 0
        %1237 = vmatpush1.bf16.msra.mxu0 %v1229
        %1238 = vmatprep.subr.bf16.mxu0 0
        %1239 = vmatpush1.bf16.msra.mxu0 %v1230
        %1240 = vmatprep.subr.bf16.mxu0 0
        %1241 = vmatpush1.bf16.msra.mxu0 0
        %1242 = vmatprep.subr.bf16.mxu0 0
        %1243 = vmatpush1.bf16.msra.mxu0 0
        %1244 = vmatprep.subr.bf16.mxu0 0
        %1245 = vmatpush1.bf16.msra.mxu0 0
        %1246 = vmatprep.subr.bf16.mxu0 0
        %1247 = vmatpush1.bf16.msra.mxu0 0
        %1248 = vmatprep.subr.bf16.mxu0 0
        %1249 = vmatpush1.bf16.msra.mxu0 0
        %1250 = vmatprep.subr.bf16.mxu0 0
        %1251 = vmatpush1.bf16.msra.mxu0 0
        %1252 = vmatprep.subr.bf16.mxu0 0
        %1253 = vmatpush1.bf16.msra.mxu0 0
        %1254 = vmatprep.subr.bf16.mxu0 0
        %1255 = vmatpush1.bf16.msra.mxu0 0
        %1256 = vmatprep.subr.bf16.mxu0 0
        %1257 = vmatpush1.bf16.msra.mxu0 0
        %1258 = vmatprep.subr.bf16.mxu0 0
        %1259 = vmatpush1.bf16.msra.mxu0 0
        %1260 = vmatprep.subr.bf16.mxu0 0
        %1261 = vmatpush1.bf16.msra.mxu0 0
        %1262 = vmatprep.subr.bf16.mxu0 0
        %1263 = vmatpush1.bf16.msra.mxu0 0
        %1264 = vmatprep.subr.bf16.mxu0 0
        %1265 = vmatpush1.bf16.msra.mxu0 0
        %1266 = vmatprep.subr.bf16.mxu0 0
        %1267 = vmatpush1.bf16.msra.mxu0 0
        %1268 = vmatprep.mubr.bf16.mxu0 0
        %1269 = vmatmul.mubr.bf16.gmra.mrb[0].mxu0 %v1234
        %v1270 = vpop.f32.mrb[0].mxu0
        %v1271 = vadd.f32 %v1219, %v1270
        %v1272 = vpop.f32.mrb[0].mxu0
        %v1273 = vpop.f32.mrb[0].mxu0
        %v1274 = vpop.f32.mrb[0].mxu0
        %1275 = vdwg.mxu0
        %v1276 = vmul.f32 %v1271, 0.5
        %v1277 = vmul.f32 %v1271, 0.044715
        %v1278 = vmul.f32 %v1277, %v1271
        %v1279 = vmul.f32 %v1278, %v1271
        %v1280 = vadd.f32 %v1271, %v1279
        %v1281 = vmul.f32 %v1280, 0.7978846
        %v1282 = vtanh.pop %v1281
        %v1283 = vadd.f32 %v1282, 1.0
        %v1284 = vmul.f32 %v1276, %v1283
        %v1285 = vpack.c.bf16 %v1284, %v1284
        %v1286 = vld [vmem:[%s11] sm:$0xf]
        %v1287 = vld [vmem:[%s11 + $0x4] sm:$0xf]
        %v1288 = vld [vmem:[%s11 + $0x8] sm:$0xf]
        %v1289 = vld [vmem:[%s11 + $0xc] sm:$0xf]
        %v1290 = vld [vmem:[%s11 + $0x10] sm:$0xf]
        %v1291 = vld [vmem:[%s11 + $0x14] sm:$0xf]
        %v1292 = vld [vmem:[%s11 + $0x18] sm:$0xf]
        %v1293 = vld [vmem:[%s11 + $0x1c] sm:$0xf]
        %v1302 = vunpack.c.l.b16 %v1286
        %v1303 = vunpack.c.l.b16 %v1287
        %v1304 = vunpack.c.l.b16 %v1288
        %v1305 = vunpack.c.l.b16 %v1289
        %v1306 = vunpack.c.l.b16 %v1290
        %v1307 = vunpack.c.l.b16 %v1291
        %v1308 = vunpack.c.l.b16 %v1292
        %v1309 = vunpack.c.l.b16 %v1293
        %v1310 = vpack.c.b16 %v1303, %v1302
        %v1311 = vpack.c.b16 %v1305, %v1304
        %v1312 = vpack.c.b16 %v1307, %v1306
        %v1313 = vpack.c.b16 %v1309, %v1308
        %vm1318 = vcmask 523264
        %v1320 = vsel %vm1318, %v1285, 0
        %1322 = vmatprep.subr.bf16.mxu0 0
        %1323 = vmatpush1.bf16.msra.mxu0 %v1310
        %1324 = vmatprep.subr.bf16.mxu0 0
        %1325 = vmatpush1.bf16.msra.mxu0 %v1311
        %1326 = vmatprep.subr.bf16.mxu0 0
        %1327 = vmatpush1.bf16.msra.mxu0 %v1312
        %1328 = vmatprep.subr.bf16.mxu0 0
        %1329 = vmatpush1.bf16.msra.mxu0 %v1313
        %1330 = vmatprep.subr.bf16.mxu0 0
        %1331 = vmatpush1.bf16.msra.mxu0 0
        %1332 = vmatprep.subr.bf16.mxu0 0
        %1333 = vmatpush1.bf16.msra.mxu0 0
        %1334 = vmatprep.subr.bf16.mxu0 0
        %1335 = vmatpush1.bf16.msra.mxu0 0
        %1336 = vmatprep.subr.bf16.mxu0 0
        %1337 = vmatpush1.bf16.msra.mxu0 0
        %1338 = vmatprep.subr.bf16.mxu0 0
        %1339 = vmatpush1.bf16.msra.mxu0 0
        %1340 = vmatprep.subr.bf16.mxu0 0
        %1341 = vmatpush1.bf16.msra.mxu0 0
        %1342 = vmatprep.subr.bf16.mxu0 0
        %1343 = vmatpush1.bf16.msra.mxu0 0
        %1344 = vmatprep.subr.bf16.mxu0 0
        %1345 = vmatpush1.bf16.msra.mxu0 0
        %1346 = vmatprep.subr.bf16.mxu0 0
        %1347 = vmatpush1.bf16.msra.mxu0 0
        %1348 = vmatprep.subr.bf16.mxu0 0
        %1349 = vmatpush1.bf16.msra.mxu0 0
        %1350 = vmatprep.subr.bf16.mxu0 0
        %1351 = vmatpush1.bf16.msra.mxu0 0
        %1352 = vmatprep.subr.bf16.mxu0 0
        %1353 = vmatpush1.bf16.msra.mxu0 0
        %1354 = vmatprep.mubr.bf16.mxu0 0
        %1355 = vmatmul.mubr.bf16.gmra.mrb[0].mxu0 %v1320
        %v1356 = vpop.f32.mrb[0].mxu0
        %v1357 = vadd.f32 0.0, %v1356
        %v1358 = vpop.f32.mrb[0].mxu0
        %v1359 = vpop.f32.mrb[0].mxu0
        %v1360 = vpop.f32.mrb[0].mxu0
        %1361 = vdwg.mxu0
        %v1362 = vadd.f32 %v1179, %v1357
        %v1363 = vld [vmem:[%s12] sm:$0x1]
        %v1365 = vlaneseq
        %v1366 = vshrl.u32 %v1365, 7
        %v1367 = vsub.s32 0, %v1366
        %v1368 = vrot.slane %v1363, %v1367
        %v1370 = vadd.f32 %v1362, %v1368
        %1371 = vst.msk [vmem:[%s482] sm:$0xff] %vm491, %v1370
        %s1372 = sand.u32 %s316, 1
        %s1373 = scalar_lea.sflag [#allocation8], %s1372
        %s1374 = sand.u32 %s316, 1
        %s1375 = smul.addr %s1374, 8
        %s1376 = scalar_lea.vmem [#allocation14], %s1375
        // Predicated region
        $region89: #{tpu_custom_call.1} parent=71 // pred_check
          %p1377 = pneg %p326
        $region90: #{tpu_custom_call.1} parent=71 // pred_check_branch
          %1379 = sbr.rel (%p1377) target = $region92
        $region91: #{tpu_custom_call.1} parent=71 // pred_region
          %s1381 = ssub.s32 128, 128
          %1382 = vsyncadd %s1373, %s1381
          %s1383 = smul.addr %s30, 128
          %s1384 = scalar_lea.hbm %s13, %s1383
          %s1386 = sshll.u32 %s1376, 4
          %s1387 = int_to_ptr.vmem [resolvable:$true] %s1386
          %1389 = dma.vmem_to_hbm [thread:$0]  %s1387, 128, %s1384, %s1373
        $region92: #{tpu_custom_call.1} parent=71 // pred_fallthru
          _
      $region72: #{tpu_custom_call.1} parent=5 // pred_fallthru
        _
      %p1390 = scmp.le.s32.totalorder 2, %s25
      // Predicated region
      $region93: #{tpu_custom_call.1} parent=5 // pred_check
        %p1391 = pneg %p1390
      $region94: #{tpu_custom_call.1} parent=5 // pred_check_branch
        %1393 = sbr.rel (%p1391) target = $region96
      $region95: #{tpu_custom_call.1} parent=5 // pred_region
        %s1394 = ssub.s32 %s25, 2
        // Predicated region
        $region97: #{tpu_custom_call.1} parent=95 // pred_check
          %p1395 = pneg %p332
        $region98: #{tpu_custom_call.1} parent=95 // pred_check_branch
          %1397 = sbr.rel (%p1395) target = $region100
        $region99: #{tpu_custom_call.1} parent=95 // pred_region
          %s1398 = sand.u32 %s317, 1
          %s1399 = scalar_lea.sflag [#allocation8], %s1398
          %s1400 = sand.u32 %s317, 1
          %s1401 = smul.addr %s1400, 8
          %s1402 = scalar_lea.vmem [#allocation14], %s1401
          %1403 = dma.done %s1399, 128
        $region100: #{tpu_custom_call.1} parent=95 // pred_fallthru
          _
      $region96: #{tpu_custom_call.1} parent=5 // pred_fallthru
        _
    $region6: #{tpu_custom_call.1} parent=1 // loop_footer
      %s29 = sadd.s32 1, %s25
    $region7: #{tpu_custom_call.1} parent=1 // loop_footer_branch
      %24 = sbr.rel target = $region3
    $region8: #{tpu_custom_call.1} parent=1 // loop_exit
      _
    %1404 = vsyncpa [#allocation7], 1
    %s1405 = scalar_lea.sflag [#allocation7], 1
    %1406 = vsyncpa %s1405, 1
    %1407 = vsyncpa [#allocation10], 1
    %1408 = vsyncpa [#allocation13], 1
    %1409 = vsyncpa [#allocation8], 1
    %s1410 = scalar_lea.sflag [#allocation8], 1
    %1411 = vsyncpa %s1410, 1

</llo_original>
